<compile_context>
chip_gen: v7x
topology: tpu7x:2x2x1
jax: 0.10.0
libtpu: 0.0.40
codegen_flags: <defaults>
</compile_context>

<pallas_src>
import functools

import jax
import jax.numpy as jnp
import numpy as np
from jax.experimental import pallas as pl
from jax.experimental.pallas import tpu as pltpu

STATE_SIZE = 4
ACTION_SIZE = 1
IN_DIM = STATE_SIZE + ACTION_SIZE   # 5
K_PAD = 8                           # padded contraction dim for layer 1
HIDDEN = 256
OUT_DIM = STATE_SIZE                # 4
OUT_COLS = 8                        # padded output width (4 -> 8)
MAX_TB = 2048                       # upper bound on the batch tile
TARGET_TILES = 4                    # >=4 tiles -> both v7x TCs get >=2 tiles


def mlp_kernel(x_ref,
               w1_ref, b1_ref,
               w2_ref, b2_ref,
               w3_ref, b3_ref,
               w4_ref, b4_ref,
               o_ref):
    # One batch tile per grid step; weights/biases are VMEM-resident.
    x = x_ref[...]                                                          # (tb, 8) bf16
    h = jnp.dot(x, w1_ref[...], preferred_element_type=jnp.float32) + b1_ref[...]
    h = jnp.maximum(h, 0.0)
    h = jnp.dot(h.astype(jnp.bfloat16), w2_ref[...],
                preferred_element_type=jnp.float32) + b2_ref[...]
    h = jnp.maximum(h, 0.0)
    h = jnp.dot(h.astype(jnp.bfloat16), w3_ref[...],
                preferred_element_type=jnp.float32) + b3_ref[...]
    h = jnp.maximum(h, 0.0)
    y = jnp.dot(h.astype(jnp.bfloat16), w4_ref[...],
                preferred_element_type=jnp.float32) + b4_ref[...]           # (tb, 8) f32
    o_ref[...] = y.astype(o_ref.dtype)


def _const(shape):
    """BlockSpec for an array that is fully resident and constant across the grid."""
    nd = len(shape)
    return pl.BlockSpec(shape, lambda i, _nd=nd: (0,) * _nd)


def _pick_tb(batch, max_tb=MAX_TB, target_tiles=TARGET_TILES):
    """Batch tile: big enough to amortize per-step overhead, small enough to
    keep >=target_tiles grid steps (keeps both v7x TensorCores busy)."""
    tb = -(-batch // target_tiles)          # ceil(batch / target_tiles)
    tb = ((tb + 127) // 128) * 128          # multiple of 128 (f32/bf16 safe)
    return max(128, min(max_tb, tb))


@functools.partial(jax.jit, static_argnames=("tb",))
def mlp_forward(x, kp, tb=None):
    """x: (B, 5) float32. kp: padded/bf16 kernel params (prepare_kernel_params)."""
    B = x.shape[0]
    if tb is None:
        tb = _pick_tb(B)
    n_tiles = pl.cdiv(B, tb)
    Bp = n_tiles * tb

    # Pad batch to a tile multiple and the contraction dim 5 -> 8, cast to
    # bf16 in the same fused op (halves the streamed x DMA).
    xp = jnp.zeros((Bp, K_PAD), jnp.bfloat16).at[:B, :IN_DIM].set(
        x.astype(jnp.bfloat16))

    # Advisory cost estimate (mem-bound kernel) for the XLA scheduler.
    weight_bytes = ((K_PAD * HIDDEN + 2 * HIDDEN * HIDDEN + HIDDEN * OUT_COLS) * 2
                    + (3 * HIDDEN + OUT_COLS) * 4)
    flops = 2 * Bp * (K_PAD * HIDDEN + 2 * HIDDEN * HIDDEN + HIDDEN * OUT_COLS)
    bytes_accessed = weight_bytes + Bp * (K_PAD * 2 + OUT_COLS * 4)

    out_padded = pl.pallas_call(
        mlp_kernel,
        out_shape=jax.ShapeDtypeStruct((Bp, OUT_COLS), jnp.float32),
        grid_spec=pltpu.PrefetchScalarGridSpec(
            num_scalar_prefetch=0,
            grid=(n_tiles,),
            in_specs=[
                pl.BlockSpec((tb, K_PAD), lambda i: (i, 0)),   # stream x tiles
                _const(kp["w1"].shape), _const(kp["b1"].shape),  # weights stay put
                _const(kp["w2"].shape), _const(kp["b2"].shape),
                _const(kp["w3"].shape), _const(kp["b3"].shape),
                _const(kp["w4"].shape), _const(kp["b4"].shape),
            ],
            out_specs=pl.BlockSpec((tb, OUT_COLS), lambda i: (i, 0)),
        ),
        compiler_params=pltpu.CompilerParams(
            dimension_semantics=("parallel",),
            vmem_limit_bytes=32 * 1024 * 1024),
        cost_estimate=pl.CostEstimate(
            flops=flops, transcendentals=0, bytes_accessed=bytes_accessed),
    )(xp, kp["w1"], kp["b1"], kp["w2"], kp["b2"],
      kp["w3"], kp["b3"], kp["w4"], kp["b4"])

    return out_padded[:B, :OUT_DIM]


def init_params(key):
    """f32 master params mimicking nn.Linear init; weights stored (in, out)."""
    ks = jax.random.split(key, 8)

    def lin(kw, kb, fan_in, fan_out):
        bound = 1.0 / np.sqrt(fan_in)
        w = jax.random.uniform(kw, (fan_in, fan_out), jnp.float32, -bound, bound)
        b = jax.random.uniform(kb, (1, fan_out), jnp.float32, -bound, bound)
        return w, b

    w1, b1 = lin(ks[0], ks[1], IN_DIM, HIDDEN)
    w2, b2 = lin(ks[2], ks[3], HIDDEN, HIDDEN)
    w3, b3 = lin(ks[4], ks[5], HIDDEN, HIDDEN)
    w4, b4 = lin(ks[6], ks[7], HIDDEN, OUT_DIM)
    return dict(w1=w1, b1=b1, w2=w2, b2=b2, w3=w3, b3=b3, w4=w4, b4=b4)


def prepare_kernel_params(p):
    """Pad layer-1 K (5->8) and layer-4 N (4->8); cast weights to bf16."""
    w1p = jnp.zeros((K_PAD, HIDDEN), jnp.bfloat16).at[:IN_DIM, :].set(
        p["w1"].astype(jnp.bfloat16))
    w4p = jnp.zeros((HIDDEN, OUT_COLS), jnp.bfloat16).at[:, :OUT_DIM].set(
        p["w4"].astype(jnp.bfloat16))
    b4p = jnp.zeros((1, OUT_COLS), jnp.float32).at[:, :OUT_DIM].set(p["b4"])
    return dict(
        w1=w1p, b1=p["b1"],
        w2=p["w2"].astype(jnp.bfloat16), b2=p["b2"],
        w3=p["w3"].astype(jnp.bfloat16), b3=p["b3"],
        w4=w4p, b4=b4p,
    )


def reference_forward(x, p):
    """Mirrors the kernel's dtype handling (bf16 weights/acts, f32 accumulation)."""
    w1 = p["w1"].astype(jnp.bfloat16)
    w2 = p["w2"].astype(jnp.bfloat16)
    w3 = p["w3"].astype(jnp.bfloat16)
    w4 = p["w4"].astype(jnp.bfloat16)
    h = jnp.dot(x.astype(jnp.bfloat16), w1,
                preferred_element_type=jnp.float32) + p["b1"]
    h = jnp.maximum(h, 0.0)
    h = jnp.dot(h.astype(jnp.bfloat16), w2,
                preferred_element_type=jnp.float32) + p["b2"]
    h = jnp.maximum(h, 0.0)
    h = jnp.dot(h.astype(jnp.bfloat16), w3,
                preferred_element_type=jnp.float32) + p["b3"]
    h = jnp.maximum(h, 0.0)
    return jnp.dot(h.astype(jnp.bfloat16), w4,
                   preferred_element_type=jnp.float32) + p["b4"]


if __name__ == "__main__":
    key = jax.random.PRNGKey(0)
    pkey, xkey = jax.random.split(key)
    params = init_params(pkey)
    kparams = prepare_kernel_params(params)

    # Batched evaluation: many (state, action) rows per pallas_call so the
    # ~330 KB weight DMA and launch overhead are amortized over the batch.
    B = 512   # auto-picked tb=128 -> 4 grid tiles (exercises the parallel axis)
    x = jax.random.uniform(xkey, (B, IN_DIM), jnp.float32, -1.0, 1.0)

    out = mlp_forward(x, kparams)          # tb chosen automatically
    out = jax.block_until_ready(out)

    ref = reference_forward(x, params)
    np.testing.assert_allclose(np.asarray(out), np.asarray(ref),
                               rtol=1e-2, atol=1e-2)
    assert out.shape == (B, OUT_DIM)
    print("KERNEL_OK")
</pallas_src>

<mosaic_0001>
module attributes {stable_mosaic.version = 11 : i64} {
  func.func @mlp_kernel(%arg0: i32, %arg1: memref<128x8xbf16, #tpu.memory_space<vmem>>, %arg2: memref<8x256xbf16, #tpu.memory_space<vmem>>, %arg3: memref<1x256xf32, #tpu.memory_space<vmem>>, %arg4: memref<256x256xbf16, #tpu.memory_space<vmem>>, %arg5: memref<1x256xf32, #tpu.memory_space<vmem>>, %arg6: memref<256x256xbf16, #tpu.memory_space<vmem>>, %arg7: memref<1x256xf32, #tpu.memory_space<vmem>>, %arg8: memref<256x8xbf16, #tpu.memory_space<vmem>>, %arg9: memref<1x8xf32, #tpu.memory_space<vmem>>, %arg10: memref<128x8xf32, #tpu.memory_space<vmem>>) attributes {dimension_semantics = [#tpu.dimension_semantics<parallel>], iteration_bounds = array<i64: 4>, scalar_prefetch = 0 : i64, scratch_operands = 0 : i64, tpu.core_type = #tpu.core_type<tc>, window_params = [{transform_indices = @transform_0, window_bounds = array<i64: 128, 8>}, {pipeline_mode = #tpu.pipeline_mode<synchronous>, transform_indices = @transform_1, window_bounds = array<i64: 8, 256>}, {pipeline_mode = #tpu.pipeline_mode<synchronous>, transform_indices = @transform_2, window_bounds = array<i64: 1, 256>}, {pipeline_mode = #tpu.pipeline_mode<synchronous>, transform_indices = @transform_3, window_bounds = array<i64: 256, 256>}, {pipeline_mode = #tpu.pipeline_mode<synchronous>, transform_indices = @transform_4, window_bounds = array<i64: 1, 256>}, {pipeline_mode = #tpu.pipeline_mode<synchronous>, transform_indices = @transform_5, window_bounds = array<i64: 256, 256>}, {pipeline_mode = #tpu.pipeline_mode<synchronous>, transform_indices = @transform_6, window_bounds = array<i64: 1, 256>}, {pipeline_mode = #tpu.pipeline_mode<synchronous>, transform_indices = @transform_7, window_bounds = array<i64: 256, 8>}, {pipeline_mode = #tpu.pipeline_mode<synchronous>, transform_indices = @transform_8, window_bounds = array<i64: 1, 8>}, {transform_indices = @transform_9, window_bounds = array<i64: 128, 8>}]} {
    %c0 = arith.constant 0 : index
    %c0_0 = arith.constant 0 : index
    %0 = vector.load %arg1[%c0, %c0_0] : memref<128x8xbf16, #tpu.memory_space<vmem>>, vector<128x8xbf16>
    %c0_1 = arith.constant 0 : index
    %c0_2 = arith.constant 0 : index
    %1 = vector.load %arg2[%c0_1, %c0_2] : memref<8x256xbf16, #tpu.memory_space<vmem>>, vector<8x256xbf16>
    %cst = arith.constant dense<0.000000e+00> : vector<128x256xf32>
    %2 = tpu.matmul %0, %1, %cst {dimension_numbers = #tpu.dot_dimension_numbers<[1], [0], [0], [1], [0, 0, 1, 1], [], []>} : vector<128x8xbf16>, vector<8x256xbf16>, vector<128x256xf32> -> vector<128x256xf32>
    %c0_3 = arith.constant 0 : index
    %c0_4 = arith.constant 0 : index
    %3 = vector.load %arg3[%c0_3, %c0_4] : memref<1x256xf32, #tpu.memory_space<vmem>>, vector<1x256xf32>
    %4 = vector.broadcast %3 : vector<1x256xf32> to vector<128x256xf32>
    %5 = arith.addf %2, %4 : vector<128x256xf32>
    %cst_5 = arith.constant 0.000000e+00 : f32
    %6 = vector.broadcast %cst_5 : f32 to vector<128x256xf32>
    %7 = arith.maximumf %5, %6 : vector<128x256xf32>
    %8 = arith.truncf %7 : vector<128x256xf32> to vector<128x256xbf16>
    %c0_6 = arith.constant 0 : index
    %c0_7 = arith.constant 0 : index
    %9 = vector.load %arg4[%c0_6, %c0_7] : memref<256x256xbf16, #tpu.memory_space<vmem>>, vector<256x256xbf16>
    %cst_8 = arith.constant dense<0.000000e+00> : vector<128x256xf32>
    %10 = tpu.matmul %8, %9, %cst_8 {dimension_numbers = #tpu.dot_dimension_numbers<[1], [0], [0], [1], [0, 0, 1, 1], [], []>} : vector<128x256xbf16>, vector<256x256xbf16>, vector<128x256xf32> -> vector<128x256xf32>
    %c0_9 = arith.constant 0 : index
    %c0_10 = arith.constant 0 : index
    %11 = vector.load %arg5[%c0_9, %c0_10] : memref<1x256xf32, #tpu.memory_space<vmem>>, vector<1x256xf32>
    %12 = vector.broadcast %11 : vector<1x256xf32> to vector<128x256xf32>
    %13 = arith.addf %10, %12 : vector<128x256xf32>
    %cst_11 = arith.constant 0.000000e+00 : f32
    %14 = vector.broadcast %cst_11 : f32 to vector<128x256xf32>
    %15 = arith.maximumf %13, %14 : vector<128x256xf32>
    %16 = arith.truncf %15 : vector<128x256xf32> to vector<128x256xbf16>
    %c0_12 = arith.constant 0 : index
    %c0_13 = arith.constant 0 : index
    %17 = vector.load %arg6[%c0_12, %c0_13] : memref<256x256xbf16, #tpu.memory_space<vmem>>, vector<256x256xbf16>
    %cst_14 = arith.constant dense<0.000000e+00> : vector<128x256xf32>
    %18 = tpu.matmul %16, %17, %cst_14 {dimension_numbers = #tpu.dot_dimension_numbers<[1], [0], [0], [1], [0, 0, 1, 1], [], []>} : vector<128x256xbf16>, vector<256x256xbf16>, vector<128x256xf32> -> vector<128x256xf32>
    %c0_15 = arith.constant 0 : index
    %c0_16 = arith.constant 0 : index
    %19 = vector.load %arg7[%c0_15, %c0_16] : memref<1x256xf32, #tpu.memory_space<vmem>>, vector<1x256xf32>
    %20 = vector.broadcast %19 : vector<1x256xf32> to vector<128x256xf32>
    %21 = arith.addf %18, %20 : vector<128x256xf32>
    %cst_17 = arith.constant 0.000000e+00 : f32
    %22 = vector.broadcast %cst_17 : f32 to vector<128x256xf32>
    %23 = arith.maximumf %21, %22 : vector<128x256xf32>
    %24 = arith.truncf %23 : vector<128x256xf32> to vector<128x256xbf16>
    %c0_18 = arith.constant 0 : index
    %c0_19 = arith.constant 0 : index
    %25 = vector.load %arg8[%c0_18, %c0_19] : memref<256x8xbf16, #tpu.memory_space<vmem>>, vector<256x8xbf16>
    %cst_20 = arith.constant dense<0.000000e+00> : vector<128x8xf32>
    %26 = tpu.matmul %24, %25, %cst_20 {dimension_numbers = #tpu.dot_dimension_numbers<[1], [0], [0], [1], [0, 0, 1, 1], [], []>} : vector<128x256xbf16>, vector<256x8xbf16>, vector<128x8xf32> -> vector<128x8xf32>
    %c0_21 = arith.constant 0 : index
    %c0_22 = arith.constant 0 : index
    %27 = vector.load %arg9[%c0_21, %c0_22] : memref<1x8xf32, #tpu.memory_space<vmem>>, vector<1x8xf32>
    %28 = vector.broadcast %27 : vector<1x8xf32> to vector<128x8xf32>
    %29 = arith.addf %26, %28 : vector<128x8xf32>
    %c0_23 = arith.constant 0 : index
    %c0_24 = arith.constant 0 : index
    %30 = vector.load %arg10[%c0_23, %c0_24] : memref<128x8xf32, #tpu.memory_space<vmem>>, vector<128x8xf32>
    tpu.vector_store %arg10[%c0_23, %c0_24], %29 {strides = array<i32>} : memref<128x8xf32, #tpu.memory_space<vmem>>, vector<128x8xf32>,
    return
  }
  func.func @transform_0(%arg0: i32) -> (i32, i32) {
    %c0_i32 = arith.constant 0 : i32
    %c0_i32_0 = arith.constant 0 : i32
    return %arg0, %c0_i32 : i32, i32
  }
  func.func @transform_1(%arg0: i32) -> (i32, i32) {
    %c0_i32 = arith.constant 0 : i32
    %c0_i32_0 = arith.constant 0 : i32
    %c0_i32_1 = arith.constant 0 : i32
    return %c0_i32, %c0_i32_0 : i32, i32
  }
  func.func @transform_2(%arg0: i32) -> (i32, i32) {
    %c0_i32 = arith.constant 0 : i32
    %c0_i32_0 = arith.constant 0 : i32
    %c0_i32_1 = arith.constant 0 : i32
    return %c0_i32, %c0_i32_0 : i32, i32
  }
  func.func @transform_3(%arg0: i32) -> (i32, i32) {
    %c0_i32 = arith.constant 0 : i32
    %c0_i32_0 = arith.constant 0 : i32
    %c0_i32_1 = arith.constant 0 : i32
    return %c0_i32, %c0_i32_0 : i32, i32
  }
  func.func @transform_4(%arg0: i32) -> (i32, i32) {
    %c0_i32 = arith.constant 0 : i32
    %c0_i32_0 = arith.constant 0 : i32
    %c0_i32_1 = arith.constant 0 : i32
    return %c0_i32, %c0_i32_0 : i32, i32
  }
  func.func @transform_5(%arg0: i32) -> (i32, i32) {
    %c0_i32 = arith.constant 0 : i32
    %c0_i32_0 = arith.constant 0 : i32
    %c0_i32_1 = arith.constant 0 : i32
    return %c0_i32, %c0_i32_0 : i32, i32
  }
  func.func @transform_6(%arg0: i32) -> (i32, i32) {
    %c0_i32 = arith.constant 0 : i32
    %c0_i32_0 = arith.constant 0 : i32
    %c0_i32_1 = arith.constant 0 : i32
    return %c0_i32, %c0_i32_0 : i32, i32
  }
  func.func @transform_7(%arg0: i32) -> (i32, i32) {
    %c0_i32 = arith.constant 0 : i32
    %c0_i32_0 = arith.constant 0 : i32
    %c0_i32_1 = arith.constant 0 : i32
    return %c0_i32, %c0_i32_0 : i32, i32
  }
  func.func @transform_8(%arg0: i32) -> (i32, i32) {
    %c0_i32 = arith.constant 0 : i32
    %c0_i32_0 = arith.constant 0 : i32
    %c0_i32_1 = arith.constant 0 : i32
    return %c0_i32, %c0_i32_0 : i32, i32
  }
  func.func @transform_9(%arg0: i32) -> (i32, i32) {
    %c0_i32 = arith.constant 0 : i32
    %c0_i32_0 = arith.constant 0 : i32
    return %arg0, %c0_i32 : i32, i32
  }
}

</mosaic_0001>

<llo_original>
// kernel: mlp_forward.1
$region0: #{mlp_forward.1}
  #allocation0 [shape = 'u32[]', space=smem, size = 0x4, offset = 0x4, fixed_abs, tag = 'smem constant byte address 0x4 - core index']
  #allocation1 [shape = 'u32[144,128]{1,0:T(1,128)}', space=vmem, size = 0x12000, scoped, tag = 'internal scratch']
  %s0 = inlined_call_operand.vmem [shape: bf16[512,8], index: 0, kind: input, shape index: {}]
  %s1 = inlined_call_operand.vmem [shape: bf16[8,256], index: 1, kind: input, shape index: {}]
  %s2 = inlined_call_operand.vmem [shape: f32[1,256], index: 2, kind: input, shape index: {}]
  %s3 = inlined_call_operand.vmem [shape: bf16[256,256], index: 3, kind: input, shape index: {}]
  %s4 = inlined_call_operand.vmem [shape: f32[1,256], index: 4, kind: input, shape index: {}]
  %s5 = inlined_call_operand.vmem [shape: bf16[256,256], index: 5, kind: input, shape index: {}]
  %s6 = inlined_call_operand.vmem [shape: f32[1,256], index: 6, kind: input, shape index: {}]
  %s7 = inlined_call_operand.vmem [shape: bf16[256,8], index: 7, kind: input, shape index: {}]
  %s8 = inlined_call_operand.vmem [shape: f32[1,8], index: 8, kind: input, shape index: {}]
  %s9 = inlined_call_operand.vmem [shape: f32[512,8], index: 9, kind: output, shape index: {}]
  %s10 = sld [smem:[#allocation0]]
  $region69: #{mlp_forward.1} parent=0
    _
  %s12 = ssub.s32 1, %s10
  %s13 = scalar_select 0, %s12, %s10
  loop: start=0, step=1, limit=6
  $region2: #{mlp_forward.1} parent=0 // loop_pre_header
    _
  $region3: #{mlp_forward.1} parent=0 // loop_header
    %s15 = sphi 0, %s19
    %p16 = scmp.ge.s32.totalorder %s15, 6
    %s25 = sphi 0, %s27
    %s28 = sphi 0, %s25
    %s29 = sphi 0, %s28
    %s45 = sphi 0, %s29
    %s49 = sphi 0, %s49
    %s51 = sphi 0, %s49
    %s52 = sphi 0, %s51
    %s66 = sphi 0, %s52
    %s70 = sphi 0, %s70
    %s72 = sphi 0, %s70
    %s73 = sphi 0, %s72
    %s87 = sphi 0, %s73
    %s91 = sphi 0, %s91
    %s93 = sphi 0, %s91
    %s94 = sphi 0, %s93
    %s108 = sphi 0, %s94
    %s112 = sphi 0, %s112
    %s114 = sphi 0, %s112
    %s115 = sphi 0, %s114
    %s129 = sphi 0, %s115
    %s133 = sphi 0, %s133
    %s135 = sphi 0, %s133
    %s136 = sphi 0, %s135
    %s150 = sphi 0, %s136
    %s154 = sphi 0, %s154
    %s156 = sphi 0, %s154
    %s157 = sphi 0, %s156
    %s171 = sphi 0, %s157
    %s175 = sphi 0, %s175
    %s177 = sphi 0, %s175
    %s178 = sphi 0, %s177
    %s192 = sphi 0, %s178
    %s196 = sphi 0, %s196
    %s198 = sphi 0, %s196
    %s199 = sphi 0, %s198
    %s213 = sphi 0, %s199
    %s219 = sphi 0, %s221
    %s222 = sphi 0, %s219
    %s223 = sphi 0, %s222
    %s239 = sphi 0, %s223
  $region4: #{mlp_forward.1} parent=0 // loop_header_branch
    %18 = sbr.rel (%p16) target = $region8
  $region5: #{mlp_forward.1} parent=0 // loop_body
    %s20 = ssub.s32 %s15, 1
    %s21 = ssub.s32 %s15, 2
    %s22 = sadd.s32 %s15, 1
    %s23 = ssub.s32 %s15, %s22
    %p24 = scmp.eq.s32.totalorder %s23, 0
    %s26 = sadd.s32 %s25, 1
    %s27 = scalar_select %p24, %s25, %s26
    %p30 = pneg %p24
    %p31 = scmp.eq.s32.totalorder %s15, 3
    %p32 = por %p30, %p31
    %p33 = scmp.ne.s32.totalorder %s25, %s28
    %p34 = scmp.eq.s32.totalorder %s15, 0
    %p35 = por %p33, %p34
    %p36 = scmp.ne.s32.totalorder %s25, %s28
    %p37 = scmp.eq.s32.totalorder %s20, 3
    %p38 = por %p36, %p37
    %p39 = scmp.ne.s32.totalorder %s28, %s29
    %p40 = scmp.eq.s32.totalorder %s20, 0
    %p41 = por %p39, %p40
    %p42 = scmp.ne.s32.totalorder %s28, %s29
    %p43 = scmp.eq.s32.totalorder %s21, 3
    %p44 = por %p42, %p43
    %p46 = scmp.ne.s32.totalorder %s29, %s45
    %p47 = scmp.eq.s32.totalorder %s21, 0
    %p48 = por %p46, %p47
    %s50 = sadd.s32 %s49, 1
    %p53 = scmp.eq.s32.totalorder %s15, 3
    %p54 = scmp.ne.s32.totalorder %s49, %s51
    %p55 = scmp.eq.s32.totalorder %s15, 0
    %p56 = por %p54, %p55
    %p57 = scmp.ne.s32.totalorder %s49, %s51
    %p58 = scmp.eq.s32.totalorder %s20, 3
    %p59 = por %p57, %p58
    %p60 = scmp.ne.s32.totalorder %s51, %s52
    %p61 = scmp.eq.s32.totalorder %s20, 0
    %p62 = por %p60, %p61
    %p63 = scmp.ne.s32.totalorder %s51, %s52
    %p64 = scmp.eq.s32.totalorder %s21, 3
    %p65 = por %p63, %p64
    %p67 = scmp.ne.s32.totalorder %s52, %s66
    %p68 = scmp.eq.s32.totalorder %s21, 0
    %p69 = por %p67, %p68
    %s71 = sadd.s32 %s70, 1
    %p74 = scmp.eq.s32.totalorder %s15, 3
    %p75 = scmp.ne.s32.totalorder %s70, %s72
    %p76 = scmp.eq.s32.totalorder %s15, 0
    %p77 = por %p75, %p76
    %p78 = scmp.ne.s32.totalorder %s70, %s72
    %p79 = scmp.eq.s32.totalorder %s20, 3
    %p80 = por %p78, %p79
    %p81 = scmp.ne.s32.totalorder %s72, %s73
    %p82 = scmp.eq.s32.totalorder %s20, 0
    %p83 = por %p81, %p82
    %p84 = scmp.ne.s32.totalorder %s72, %s73
    %p85 = scmp.eq.s32.totalorder %s21, 3
    %p86 = por %p84, %p85
    %p88 = scmp.ne.s32.totalorder %s73, %s87
    %p89 = scmp.eq.s32.totalorder %s21, 0
    %p90 = por %p88, %p89
    %s92 = sadd.s32 %s91, 1
    %p95 = scmp.eq.s32.totalorder %s15, 3
    %p96 = scmp.ne.s32.totalorder %s91, %s93
    %p97 = scmp.eq.s32.totalorder %s15, 0
    %p98 = por %p96, %p97
    %p99 = scmp.ne.s32.totalorder %s91, %s93
    %p100 = scmp.eq.s32.totalorder %s20, 3
    %p101 = por %p99, %p100
    %p102 = scmp.ne.s32.totalorder %s93, %s94
    %p103 = scmp.eq.s32.totalorder %s20, 0
    %p104 = por %p102, %p103
    %p105 = scmp.ne.s32.totalorder %s93, %s94
    %p106 = scmp.eq.s32.totalorder %s21, 3
    %p107 = por %p105, %p106
    %p109 = scmp.ne.s32.totalorder %s94, %s108
    %p110 = scmp.eq.s32.totalorder %s21, 0
    %p111 = por %p109, %p110
    %s113 = sadd.s32 %s112, 1
    %p116 = scmp.eq.s32.totalorder %s15, 3
    %p117 = scmp.ne.s32.totalorder %s112, %s114
    %p118 = scmp.eq.s32.totalorder %s15, 0
    %p119 = por %p117, %p118
    %p120 = scmp.ne.s32.totalorder %s112, %s114
    %p121 = scmp.eq.s32.totalorder %s20, 3
    %p122 = por %p120, %p121
    %p123 = scmp.ne.s32.totalorder %s114, %s115
    %p124 = scmp.eq.s32.totalorder %s20, 0
    %p125 = por %p123, %p124
    %p126 = scmp.ne.s32.totalorder %s114, %s115
    %p127 = scmp.eq.s32.totalorder %s21, 3
    %p128 = por %p126, %p127
    %p130 = scmp.ne.s32.totalorder %s115, %s129
    %p131 = scmp.eq.s32.totalorder %s21, 0
    %p132 = por %p130, %p131
    %s134 = sadd.s32 %s133, 1
    %p137 = scmp.eq.s32.totalorder %s15, 3
    %p138 = scmp.ne.s32.totalorder %s133, %s135
    %p139 = scmp.eq.s32.totalorder %s15, 0
    %p140 = por %p138, %p139
    %p141 = scmp.ne.s32.totalorder %s133, %s135
    %p142 = scmp.eq.s32.totalorder %s20, 3
    %p143 = por %p141, %p142
    %p144 = scmp.ne.s32.totalorder %s135, %s136
    %p145 = scmp.eq.s32.totalorder %s20, 0
    %p146 = por %p144, %p145
    %p147 = scmp.ne.s32.totalorder %s135, %s136
    %p148 = scmp.eq.s32.totalorder %s21, 3
    %p149 = por %p147, %p148
    %p151 = scmp.ne.s32.totalorder %s136, %s150
    %p152 = scmp.eq.s32.totalorder %s21, 0
    %p153 = por %p151, %p152
    %s155 = sadd.s32 %s154, 1
    %p158 = scmp.eq.s32.totalorder %s15, 3
    %p159 = scmp.ne.s32.totalorder %s154, %s156
    %p160 = scmp.eq.s32.totalorder %s15, 0
    %p161 = por %p159, %p160
    %p162 = scmp.ne.s32.totalorder %s154, %s156
    %p163 = scmp.eq.s32.totalorder %s20, 3
    %p164 = por %p162, %p163
    %p165 = scmp.ne.s32.totalorder %s156, %s157
    %p166 = scmp.eq.s32.totalorder %s20, 0
    %p167 = por %p165, %p166
    %p168 = scmp.ne.s32.totalorder %s156, %s157
    %p169 = scmp.eq.s32.totalorder %s21, 3
    %p170 = por %p168, %p169
    %p172 = scmp.ne.s32.totalorder %s157, %s171
    %p173 = scmp.eq.s32.totalorder %s21, 0
    %p174 = por %p172, %p173
    %s176 = sadd.s32 %s175, 1
    %p179 = scmp.eq.s32.totalorder %s15, 3
    %p180 = scmp.ne.s32.totalorder %s175, %s177
    %p181 = scmp.eq.s32.totalorder %s15, 0
    %p182 = por %p180, %p181
    %p183 = scmp.ne.s32.totalorder %s175, %s177
    %p184 = scmp.eq.s32.totalorder %s20, 3
    %p185 = por %p183, %p184
    %p186 = scmp.ne.s32.totalorder %s177, %s178
    %p187 = scmp.eq.s32.totalorder %s20, 0
    %p188 = por %p186, %p187
    %p189 = scmp.ne.s32.totalorder %s177, %s178
    %p190 = scmp.eq.s32.totalorder %s21, 3
    %p191 = por %p189, %p190
    %p193 = scmp.ne.s32.totalorder %s178, %s192
    %p194 = scmp.eq.s32.totalorder %s21, 0
    %p195 = por %p193, %p194
    %s197 = sadd.s32 %s196, 1
    %p200 = scmp.eq.s32.totalorder %s15, 3
    %p201 = scmp.ne.s32.totalorder %s196, %s198
    %p202 = scmp.eq.s32.totalorder %s15, 0
    %p203 = por %p201, %p202
    %p204 = scmp.ne.s32.totalorder %s196, %s198
    %p205 = scmp.eq.s32.totalorder %s20, 3
    %p206 = por %p204, %p205
    %p207 = scmp.ne.s32.totalorder %s198, %s199
    %p208 = scmp.eq.s32.totalorder %s20, 0
    %p209 = por %p207, %p208
    %p210 = scmp.ne.s32.totalorder %s198, %s199
    %p211 = scmp.eq.s32.totalorder %s21, 3
    %p212 = por %p210, %p211
    %p214 = scmp.ne.s32.totalorder %s199, %s213
    %p215 = scmp.eq.s32.totalorder %s21, 0
    %p216 = por %p214, %p215
    %s217 = ssub.s32 %s15, %s22
    %p218 = scmp.eq.s32.totalorder %s217, 0
    %s220 = sadd.s32 %s219, 1
    %s221 = scalar_select %p218, %s219, %s220
    %p224 = pneg %p218
    %p225 = scmp.eq.s32.totalorder %s15, 3
    %p226 = por %p224, %p225
    %p227 = scmp.ne.s32.totalorder %s219, %s222
    %p228 = scmp.eq.s32.totalorder %s15, 0
    %p229 = por %p227, %p228
    %p230 = scmp.ne.s32.totalorder %s219, %s222
    %p231 = scmp.eq.s32.totalorder %s20, 3
    %p232 = por %p230, %p231
    %p233 = scmp.ne.s32.totalorder %s222, %s223
    %p234 = scmp.eq.s32.totalorder %s20, 0
    %p235 = por %p233, %p234
    %p236 = scmp.ne.s32.totalorder %s222, %s223
    %p237 = scmp.eq.s32.totalorder %s21, 3
    %p238 = por %p236, %p237
    %p240 = scmp.ne.s32.totalorder %s223, %s239
    %p241 = scmp.eq.s32.totalorder %s21, 0
    %p242 = por %p240, %p241
    %p243 = scmp.le.s32.totalorder 1, %s15
    %p244 = scmp.lt.s32.totalorder %s15, 5
    %p245 = pnand %p243, %p244
    %p246 = pneg %p245
    // Predicated region
    $region9: #{mlp_forward.1} parent=5 // pred_check
      _
    $region10: #{mlp_forward.1} parent=5 // pred_check_branch
      %248 = sbr.rel (%p245) target = $region12
    $region11: #{mlp_forward.1} parent=5 // pred_region
      %s249 = ssub.s32 %s15, 1
      // Predicated region
      $region13: #{mlp_forward.1} parent=11 // pred_check
        %p250 = pneg %p62
      $region14: #{mlp_forward.1} parent=11 // pred_check_branch
        %252 = sbr.rel (%p250) target = $region16
      $region15: #{mlp_forward.1} parent=11 // pred_region
        _
      $region16: #{mlp_forward.1} parent=11 // pred_fallthru
        _
      // Predicated region
      $region17: #{mlp_forward.1} parent=11 // pred_check
        %p253 = pneg %p83
      $region18: #{mlp_forward.1} parent=11 // pred_check_branch
        %255 = sbr.rel (%p253) target = $region20
      $region19: #{mlp_forward.1} parent=11 // pred_region
        _
      $region20: #{mlp_forward.1} parent=11 // pred_fallthru
        _
      // Predicated region
      $region21: #{mlp_forward.1} parent=11 // pred_check
        %p256 = pneg %p104
      $region22: #{mlp_forward.1} parent=11 // pred_check_branch
        %258 = sbr.rel (%p256) target = $region24
      $region23: #{mlp_forward.1} parent=11 // pred_region
        _
      $region24: #{mlp_forward.1} parent=11 // pred_fallthru
        _
      // Predicated region
      $region25: #{mlp_forward.1} parent=11 // pred_check
        %p259 = pneg %p125
      $region26: #{mlp_forward.1} parent=11 // pred_check_branch
        %261 = sbr.rel (%p259) target = $region28
      $region27: #{mlp_forward.1} parent=11 // pred_region
        _
      $region28: #{mlp_forward.1} parent=11 // pred_fallthru
        _
      // Predicated region
      $region29: #{mlp_forward.1} parent=11 // pred_check
        %p262 = pneg %p146
      $region30: #{mlp_forward.1} parent=11 // pred_check_branch
        %264 = sbr.rel (%p262) target = $region32
      $region31: #{mlp_forward.1} parent=11 // pred_region
        _
      $region32: #{mlp_forward.1} parent=11 // pred_fallthru
        _
      // Predicated region
      $region33: #{mlp_forward.1} parent=11 // pred_check
        %p265 = pneg %p167
      $region34: #{mlp_forward.1} parent=11 // pred_check_branch
        %267 = sbr.rel (%p265) target = $region36
      $region35: #{mlp_forward.1} parent=11 // pred_region
        _
      $region36: #{mlp_forward.1} parent=11 // pred_fallthru
        _
      // Predicated region
      $region37: #{mlp_forward.1} parent=11 // pred_check
        %p268 = pneg %p188
      $region38: #{mlp_forward.1} parent=11 // pred_check_branch
        %270 = sbr.rel (%p268) target = $region40
      $region39: #{mlp_forward.1} parent=11 // pred_region
        _
      $region40: #{mlp_forward.1} parent=11 // pred_fallthru
        _
      // Predicated region
      $region41: #{mlp_forward.1} parent=11 // pred_check
        %p271 = pneg %p209
      $region42: #{mlp_forward.1} parent=11 // pred_check_branch
        %273 = sbr.rel (%p271) target = $region44
      $region43: #{mlp_forward.1} parent=11 // pred_region
        _
      $region44: #{mlp_forward.1} parent=11 // pred_fallthru
        _
    $region12: #{mlp_forward.1} parent=5 // pred_fallthru
      _
    %p274 = scmp.lt.s32.totalorder %s15, 4
    // Predicated region
    $region45: #{mlp_forward.1} parent=5 // pred_check
      %p275 = pneg %p274
    $region46: #{mlp_forward.1} parent=5 // pred_check_branch
      %277 = sbr.rel (%p275) target = $region48
    $region47: #{mlp_forward.1} parent=5 // pred_region
      // Predicated region
      $region49: #{mlp_forward.1} parent=47 // pred_check
        %p278 = pneg %p35
      $region50: #{mlp_forward.1} parent=47 // pred_check_branch
        %280 = sbr.rel (%p278) target = $region52
      $region51: #{mlp_forward.1} parent=47 // pred_region
        %s281 = smul.u32 16, %s15
        %p282 = scmp.lt.s32.totalorder %s281, 63
        %s283 = scalar_select %p282, %s281, 63
        %s284 = smul.addr %s283, 4
        %s285 = scalar_lea.vmem %s0, %s284
        %s286 = smul.u32 16, %s15
      $region52: #{mlp_forward.1} parent=47 // pred_fallthru
        _
    $region48: #{mlp_forward.1} parent=5 // pred_fallthru
      _
    %p287 = scmp.le.s32.totalorder 1, %s15
    %p288 = scmp.lt.s32.totalorder %s15, 5
    %p289 = pnand %p287, %p288
    %p290 = pneg %p289
    // Predicated region
    $region53: #{mlp_forward.1} parent=5 // pred_check
      _
    $region54: #{mlp_forward.1} parent=5 // pred_check_branch
      %292 = sbr.rel (%p289) target = $region56
    $region55: #{mlp_forward.1} parent=5 // pred_region
      %s293 = ssub.s32 %s15, 1
      %s294 = smul.u32 16, %s20
      %p295 = scmp.lt.s32.totalorder %s294, 63
      %s296 = scalar_select %p295, %s294, 63
      %s297 = smul.addr %s296, 4
      %s298 = scalar_lea.vmem %s0, %s297
      %p299 = pneg %p41
      %p300 = pneg %p38
      %p301 = pneg %p62
      %p302 = pneg %p59
      %p303 = pneg %p83
      %p304 = pneg %p80
      %p305 = pneg %p104
      %p306 = pneg %p101
      %p307 = pneg %p125
      %p308 = pneg %p122
      %p309 = pneg %p146
      %p310 = pneg %p143
      %p311 = pneg %p167
      %p312 = pneg %p164
      %p313 = pneg %p188
      %p314 = pneg %p185
      %p315 = pneg %p209
      %p316 = pneg %p206
      %p317 = pneg %p235
      %p318 = pneg %p232
      %s319 = smul.u32 16, %s20
      %p320 = scmp.lt.s32.totalorder %s319, 63
      %s321 = scalar_select %p320, %s319, 63
      %s322 = smul.addr %s321, 8
      %s323 = scalar_lea.vmem %s9, %s322
      %s324 = smul.u32 16, %s20
      %p325 = scmp.lt.s32.totalorder %s324, 63
      %s326 = scalar_select %p325, %s324, 63
      %s327 = smul.addr %s326, 4
      %s328 = scalar_lea.vmem %s0, %s327
      %s329 = smul.u32 16, %s20
      %s330 = smul.u32 16, %s20
      %p331 = scmp.lt.s32.totalorder %s330, 63
      %s332 = scalar_select %p331, %s330, 63
      %s333 = smul.addr %s332, 8
      %s334 = scalar_lea.vmem %s9, %s333
      %s335 = smul.u32 16, %s20
      %v337 = vld [vmem:[%s328] sm:$0xf]
      %v338 = vld [vmem:[%s328 + $0x4] sm:$0xf]
      %v339 = vld [vmem:[%s328 + $0x8] sm:$0xf]
      %v340 = vld [vmem:[%s328 + $0xc] sm:$0xf]
      %v341 = vld [vmem:[%s328 + $0x10] sm:$0xf]
      %v342 = vld [vmem:[%s328 + $0x14] sm:$0xf]
      %v343 = vld [vmem:[%s328 + $0x18] sm:$0xf]
      %v344 = vld [vmem:[%s328 + $0x1c] sm:$0xf]
      %v345 = vld [vmem:[%s328 + $0x20] sm:$0xf]
      %v346 = vld [vmem:[%s328 + $0x24] sm:$0xf]
      %v347 = vld [vmem:[%s328 + $0x28] sm:$0xf]
      %v348 = vld [vmem:[%s328 + $0x2c] sm:$0xf]
      %v349 = vld [vmem:[%s328 + $0x30] sm:$0xf]
      %v350 = vld [vmem:[%s328 + $0x34] sm:$0xf]
      %v351 = vld [vmem:[%s328 + $0x38] sm:$0xf]
      %v352 = vld [vmem:[%s328 + $0x3c] sm:$0xf]
      %v353 = vld [vmem:[%s1] sm:$0xff]
      %v354 = vld [vmem:[%s2] sm:$0x3]
      %v356 = vlaneseq
      %v357 = vshrl.u32 %v356, 7
      %v358 = vsub.s32 0, %v357
      %v359 = vrot.slane %v354, %v358
      %v360 = vlaneseq
      %v361 = vshrl.u32 %v360, 7
      %v362 = vsub.s32 1, %v361
      %v363 = vrot.slane %v354, %v362
      %v382 = vunpack.c.l.b16 %v337
      %v383 = vunpack.c.l.b16 %v338
      %v384 = vunpack.c.l.b16 %v339
      %v385 = vunpack.c.l.b16 %v340
      %v386 = vunpack.c.l.b16 %v341
      %v387 = vunpack.c.l.b16 %v342
      %v388 = vunpack.c.l.b16 %v343
      %v389 = vunpack.c.l.b16 %v344
      %v390 = vunpack.c.l.b16 %v345
      %v391 = vunpack.c.l.b16 %v346
      %v392 = vunpack.c.l.b16 %v347
      %v393 = vunpack.c.l.b16 %v348
      %v394 = vunpack.c.l.b16 %v349
      %v395 = vunpack.c.l.b16 %v350
      %v396 = vunpack.c.l.b16 %v351
      %v397 = vunpack.c.l.b16 %v352
      %v398 = vpack.c.b16 %v383, %v382
      %v399 = vpack.c.b16 %v385, %v384
      %v400 = vpack.c.b16 %v387, %v386
      %v401 = vpack.c.b16 %v389, %v388
      %v402 = vpack.c.b16 %v391, %v390
      %v403 = vpack.c.b16 %v393, %v392
      %v404 = vpack.c.b16 %v395, %v394
      %v405 = vpack.c.b16 %v397, %v396
      %v407 = vunpack.c.l.b16 %v353
      %v408 = vunpack.c.h.b16 %v353
      %v409 = vpack.c.b16 %v407, %v407
      %v410 = vpack.c.b16 %v408, %v408
      %vm411 = vcmask 64512
      %v413 = vsel %vm411, %v398, 0
      %v416 = vsel %vm411, %v399, 0
      %v419 = vsel %vm411, %v400, 0
      %v422 = vsel %vm411, %v401, 0
      %v425 = vsel %vm411, %v402, 0
      %v428 = vsel %vm411, %v403, 0
      %v431 = vsel %vm411, %v404, 0
      %v434 = vsel %vm411, %v405, 0
      %vm436 = vcmask 1043456
      %v438 = vsel %vm436, %v409, 0
      %v441 = vsel %vm436, %v410, 0
      %443 = vmatprep.subr.bf16.mxu0 %v441
      %444 = vmatpush1.bf16.msra.mxu0 %v438
      %445 = vmatprep.subr.bf16.mxu0 0
      %446 = vmatpush1.bf16.msra.mxu0 0
      %447 = vmatprep.subr.bf16.mxu0 0
      %448 = vmatpush1.bf16.msra.mxu0 0
      %449 = vmatprep.subr.bf16.mxu0 0
      %450 = vmatpush1.bf16.msra.mxu0 0
      %451 = vmatprep.subr.bf16.mxu0 0
      %452 = vmatpush1.bf16.msra.mxu0 0
      %453 = vmatprep.subr.bf16.mxu0 0
      %454 = vmatpush1.bf16.msra.mxu0 0
      %455 = vmatprep.subr.bf16.mxu0 0
      %456 = vmatpush1.bf16.msra.mxu0 0
      %457 = vmatprep.subr.bf16.mxu0 0
      %458 = vmatpush1.bf16.msra.mxu0 0
      %459 = vmatprep.subr.bf16.mxu0 0
      %460 = vmatpush1.bf16.msra.mxu0 0
      %461 = vmatprep.subr.bf16.mxu0 0
      %462 = vmatpush1.bf16.msra.mxu0 0
      %463 = vmatprep.subr.bf16.mxu0 0
      %464 = vmatpush1.bf16.msra.mxu0 0
      %465 = vmatprep.subr.bf16.mxu0 0
      %466 = vmatpush1.bf16.msra.mxu0 0
      %467 = vmatprep.subr.bf16.mxu0 0
      %468 = vmatpush1.bf16.msra.mxu0 0
      %469 = vmatprep.subr.bf16.mxu0 0
      %470 = vmatpush1.bf16.msra.mxu0 0
      %471 = vmatprep.subr.bf16.mxu0 0
      %472 = vmatpush1.bf16.msra.mxu0 0
      %473 = vmatprep.subr.bf16.mxu0 0
      %474 = vmatpush1.bf16.msra.mxu0 0
      %475 = vmatprep.mubr.bf16.mxu0 0
      %476 = vmatmul.mubr.bf16.gmra.mrb[0].mxu0 %v413
      %v477 = vpop.f32.mrb[0].mxu0
      %v478 = vadd.f32 %v359, %v477
      %v479 = vpop.f32.mrb[0].mxu0
      %v480 = vadd.f32 %v363, %v479
      %v481 = vpop.f32.mrb[0].mxu0
      %v482 = vadd.f32 %v359, %v481
      %v483 = vpop.f32.mrb[0].mxu0
      %v484 = vadd.f32 %v363, %v483
      %485 = vmatprep.mubr.bf16.mxu0 0
      %486 = vmatmul.mubr.bf16.gmra.mrb[0].mxu0 %v416
      %v487 = vpop.f32.mrb[0].mxu0
      %v488 = vadd.f32 %v359, %v487
      %v489 = vpop.f32.mrb[0].mxu0
      %v490 = vadd.f32 %v363, %v489
      %v491 = vpop.f32.mrb[0].mxu0
      %v492 = vadd.f32 %v359, %v491
      %v493 = vpop.f32.mrb[0].mxu0
      %v494 = vadd.f32 %v363, %v493
      %495 = vmatprep.mubr.bf16.mxu0 0
      %496 = vmatmul.mubr.bf16.gmra.mrb[0].mxu0 %v419
      %v497 = vpop.f32.mrb[0].mxu0
      %v498 = vadd.f32 %v359, %v497
      %v499 = vpop.f32.mrb[0].mxu0
      %v500 = vadd.f32 %v363, %v499
      %v501 = vpop.f32.mrb[0].mxu0
      %v502 = vadd.f32 %v359, %v501
      %v503 = vpop.f32.mrb[0].mxu0
      %v504 = vadd.f32 %v363, %v503
      %505 = vmatprep.mubr.bf16.mxu0 0
      %506 = vmatmul.mubr.bf16.gmra.mrb[0].mxu0 %v422
      %v507 = vpop.f32.mrb[0].mxu0
      %v508 = vadd.f32 %v359, %v507
      %v509 = vpop.f32.mrb[0].mxu0
      %v510 = vadd.f32 %v363, %v509
      %v511 = vpop.f32.mrb[0].mxu0
      %v512 = vadd.f32 %v359, %v511
      %v513 = vpop.f32.mrb[0].mxu0
      %v514 = vadd.f32 %v363, %v513
      %515 = vmatprep.mubr.bf16.mxu0 0
      %516 = vmatmul.mubr.bf16.gmra.mrb[0].mxu0 %v425
      %v517 = vpop.f32.mrb[0].mxu0
      %v518 = vadd.f32 %v359, %v517
      %v519 = vpop.f32.mrb[0].mxu0
      %v520 = vadd.f32 %v363, %v519
      %v521 = vpop.f32.mrb[0].mxu0
      %v522 = vadd.f32 %v359, %v521
      %v523 = vpop.f32.mrb[0].mxu0
      %v524 = vadd.f32 %v363, %v523
      %525 = vmatprep.mubr.bf16.mxu0 0
      %526 = vmatmul.mubr.bf16.gmra.mrb[0].mxu0 %v428
      %v527 = vpop.f32.mrb[0].mxu0
      %v528 = vadd.f32 %v359, %v527
      %v529 = vpop.f32.mrb[0].mxu0
      %v530 = vadd.f32 %v363, %v529
      %v531 = vpop.f32.mrb[0].mxu0
      %v532 = vadd.f32 %v359, %v531
      %v533 = vpop.f32.mrb[0].mxu0
      %v534 = vadd.f32 %v363, %v533
      %535 = vmatprep.mubr.bf16.mxu0 0
      %536 = vmatmul.mubr.bf16.gmra.mrb[0].mxu0 %v431
      %v537 = vpop.f32.mrb[0].mxu0
      %v538 = vadd.f32 %v359, %v537
      %v539 = vpop.f32.mrb[0].mxu0
      %v540 = vadd.f32 %v363, %v539
      %v541 = vpop.f32.mrb[0].mxu0
      %v542 = vadd.f32 %v359, %v541
      %v543 = vpop.f32.mrb[0].mxu0
      %v544 = vadd.f32 %v363, %v543
      %545 = vmatprep.mubr.bf16.mxu0 0
      %546 = vmatmul.mubr.bf16.gmra.mrb[0].mxu0 %v434
      %v547 = vpop.f32.mrb[0].mxu0
      %v548 = vadd.f32 %v359, %v547
      %v549 = vpop.f32.mrb[0].mxu0
      %v550 = vadd.f32 %v363, %v549
      %v551 = vpop.f32.mrb[0].mxu0
      %v552 = vadd.f32 %v359, %v551
      %v553 = vpop.f32.mrb[0].mxu0
      %v554 = vadd.f32 %v363, %v553
      %555 = vdwg.mxu0
      %v556 = vmax.f32 %v478, 0.0
      %v557 = vmax.f32 %v480, 0.0
      %v558 = vmax.f32 %v482, 0.0
      %v559 = vmax.f32 %v484, 0.0
      %v560 = vmax.f32 %v488, 0.0
      %v561 = vmax.f32 %v490, 0.0
      %v562 = vmax.f32 %v492, 0.0
      %v563 = vmax.f32 %v494, 0.0
      %v564 = vmax.f32 %v498, 0.0
      %v565 = vmax.f32 %v500, 0.0
      %v566 = vmax.f32 %v502, 0.0
      %v567 = vmax.f32 %v504, 0.0
      %v568 = vmax.f32 %v508, 0.0
      %v569 = vmax.f32 %v510, 0.0
      %v570 = vmax.f32 %v512, 0.0
      %v571 = vmax.f32 %v514, 0.0
      %v572 = vmax.f32 %v518, 0.0
      %v573 = vmax.f32 %v520, 0.0
      %v574 = vmax.f32 %v522, 0.0
      %v575 = vmax.f32 %v524, 0.0
      %v576 = vmax.f32 %v528, 0.0
      %v577 = vmax.f32 %v530, 0.0
      %v578 = vmax.f32 %v532, 0.0
      %v579 = vmax.f32 %v534, 0.0
      %v580 = vmax.f32 %v538, 0.0
      %v581 = vmax.f32 %v540, 0.0
      %v582 = vmax.f32 %v542, 0.0
      %v583 = vmax.f32 %v544, 0.0
      %v584 = vmax.f32 %v548, 0.0
      %v585 = vmax.f32 %v550, 0.0
      %v586 = vmax.f32 %v552, 0.0
      %v587 = vmax.f32 %v554, 0.0
      %v588 = vpack.c.bf16 %v558, %v556
      %v589 = vpack.c.bf16 %v559, %v557
      %v590 = vpack.c.bf16 %v562, %v560
      %v591 = vpack.c.bf16 %v563, %v561
      %v592 = vpack.c.bf16 %v566, %v564
      %v593 = vpack.c.bf16 %v567, %v565
      %v594 = vpack.c.bf16 %v570, %v568
      %v595 = vpack.c.bf16 %v571, %v569
      %v596 = vpack.c.bf16 %v574, %v572
      %v597 = vpack.c.bf16 %v575, %v573
      %v598 = vpack.c.bf16 %v578, %v576
      %v599 = vpack.c.bf16 %v579, %v577
      %v600 = vpack.c.bf16 %v582, %v580
      %v601 = vpack.c.bf16 %v583, %v581
      %v602 = vpack.c.bf16 %v586, %v584
      %v603 = vpack.c.bf16 %v587, %v585
      %v604 = vld [vmem:[%s3] sm:$0xff]
      %v605 = vld [vmem:[%s3 + $0x8] sm:$0xff]
      %v606 = vld [vmem:[%s3 + $0x10] sm:$0xff]
      %v607 = vld [vmem:[%s3 + $0x18] sm:$0xff]
      %v608 = vld [vmem:[%s3 + $0x20] sm:$0xff]
      %v609 = vld [vmem:[%s3 + $0x28] sm:$0xff]
      %v610 = vld [vmem:[%s3 + $0x30] sm:$0xff]
      %v611 = vld [vmem:[%s3 + $0x38] sm:$0xff]
      %v612 = vld [vmem:[%s3 + $0x40] sm:$0xff]
      %v613 = vld [vmem:[%s3 + $0x48] sm:$0xff]
      %v614 = vld [vmem:[%s3 + $0x50] sm:$0xff]
      %v615 = vld [vmem:[%s3 + $0x58] sm:$0xff]
      %v616 = vld [vmem:[%s3 + $0x60] sm:$0xff]
      %v617 = vld [vmem:[%s3 + $0x68] sm:$0xff]
      %v618 = vld [vmem:[%s3 + $0x70] sm:$0xff]
      %v619 = vld [vmem:[%s3 + $0x78] sm:$0xff]
      %v620 = vld [vmem:[%s3 + $0x80] sm:$0xff]
      %v621 = vld [vmem:[%s3 + $0x88] sm:$0xff]
      %v622 = vld [vmem:[%s3 + $0x90] sm:$0xff]
      %v623 = vld [vmem:[%s3 + $0x98] sm:$0xff]
      %v624 = vld [vmem:[%s3 + $0xa0] sm:$0xff]
      %v625 = vld [vmem:[%s3 + $0xa8] sm:$0xff]
      %v626 = vld [vmem:[%s3 + $0xb0] sm:$0xff]
      %v627 = vld [vmem:[%s3 + $0xb8] sm:$0xff]
      %v628 = vld [vmem:[%s3 + $0xc0] sm:$0xff]
      %v629 = vld [vmem:[%s3 + $0xc8] sm:$0xff]
      %v630 = vld [vmem:[%s3 + $0xd0] sm:$0xff]
      %v631 = vld [vmem:[%s3 + $0xd8] sm:$0xff]
      %v632 = vld [vmem:[%s3 + $0xe0] sm:$0xff]
      %v633 = vld [vmem:[%s3 + $0xe8] sm:$0xff]
      %v634 = vld [vmem:[%s3 + $0xf0] sm:$0xff]
      %v635 = vld [vmem:[%s3 + $0xf8] sm:$0xff]
      %v636 = vld [vmem:[%s4] sm:$0x3]
      %v638 = vlaneseq
      %v639 = vshrl.u32 %v638, 7
      %v640 = vsub.s32 0, %v639
      %v641 = vrot.slane %v636, %v640
      %v642 = vlaneseq
      %v643 = vshrl.u32 %v642, 7
      %v644 = vsub.s32 1, %v643
      %v645 = vrot.slane %v636, %v644
      %v680 = vunpack.c.l.b16 %v604
      %v681 = vunpack.c.h.b16 %v604
      %v682 = vunpack.c.l.b16 %v605
      %v683 = vunpack.c.h.b16 %v605
      %v684 = vunpack.c.l.b16 %v606
      %v685 = vunpack.c.h.b16 %v606
      %v686 = vunpack.c.l.b16 %v607
      %v687 = vunpack.c.h.b16 %v607
      %v688 = vunpack.c.l.b16 %v608
      %v689 = vunpack.c.h.b16 %v608
      %v690 = vunpack.c.l.b16 %v609
      %v691 = vunpack.c.h.b16 %v609
      %v692 = vunpack.c.l.b16 %v610
      %v693 = vunpack.c.h.b16 %v610
      %v694 = vunpack.c.l.b16 %v611
      %v695 = vunpack.c.h.b16 %v611
      %v696 = vunpack.c.l.b16 %v612
      %v697 = vunpack.c.h.b16 %v612
      %v698 = vunpack.c.l.b16 %v613
      %v699 = vunpack.c.h.b16 %v613
      %v700 = vunpack.c.l.b16 %v614
      %v701 = vunpack.c.h.b16 %v614
      %v702 = vunpack.c.l.b16 %v615
      %v703 = vunpack.c.h.b16 %v615
      %v704 = vunpack.c.l.b16 %v616
      %v705 = vunpack.c.h.b16 %v616
      %v706 = vunpack.c.l.b16 %v617
      %v707 = vunpack.c.h.b16 %v617
      %v708 = vunpack.c.l.b16 %v618
      %v709 = vunpack.c.h.b16 %v618
      %v710 = vunpack.c.l.b16 %v619
      %v711 = vunpack.c.h.b16 %v619
      %v712 = vunpack.c.l.b16 %v620
      %v713 = vunpack.c.h.b16 %v620
      %v714 = vunpack.c.l.b16 %v621
      %v715 = vunpack.c.h.b16 %v621
      %v716 = vunpack.c.l.b16 %v622
      %v717 = vunpack.c.h.b16 %v622
      %v718 = vunpack.c.l.b16 %v623
      %v719 = vunpack.c.h.b16 %v623
      %v720 = vunpack.c.l.b16 %v624
      %v721 = vunpack.c.h.b16 %v624
      %v722 = vunpack.c.l.b16 %v625
      %v723 = vunpack.c.h.b16 %v625
      %v724 = vunpack.c.l.b16 %v626
      %v725 = vunpack.c.h.b16 %v626
      %v726 = vunpack.c.l.b16 %v627
      %v727 = vunpack.c.h.b16 %v627
      %v728 = vunpack.c.l.b16 %v628
      %v729 = vunpack.c.h.b16 %v628
      %v730 = vunpack.c.l.b16 %v629
      %v731 = vunpack.c.h.b16 %v629
      %v732 = vunpack.c.l.b16 %v630
      %v733 = vunpack.c.h.b16 %v630
      %v734 = vunpack.c.l.b16 %v631
      %v735 = vunpack.c.h.b16 %v631
      %v736 = vunpack.c.l.b16 %v632
      %v737 = vunpack.c.h.b16 %v632
      %v738 = vunpack.c.l.b16 %v633
      %v739 = vunpack.c.h.b16 %v633
      %v740 = vunpack.c.l.b16 %v634
      %v741 = vunpack.c.h.b16 %v634
      %v742 = vunpack.c.l.b16 %v635
      %v743 = vunpack.c.h.b16 %v635
      %v744 = vpack.c.b16 %v682, %v680
      %v745 = vpack.c.b16 %v683, %v681
      %v746 = vpack.c.b16 %v686, %v684
      %v747 = vpack.c.b16 %v687, %v685
      %v748 = vpack.c.b16 %v690, %v688
      %v749 = vpack.c.b16 %v691, %v689
      %v750 = vpack.c.b16 %v694, %v692
      %v751 = vpack.c.b16 %v695, %v693
      %v752 = vpack.c.b16 %v698, %v696
      %v753 = vpack.c.b16 %v699, %v697
      %v754 = vpack.c.b16 %v702, %v700
      %v755 = vpack.c.b16 %v703, %v701
      %v756 = vpack.c.b16 %v706, %v704
      %v757 = vpack.c.b16 %v707, %v705
      %v758 = vpack.c.b16 %v710, %v708
      %v759 = vpack.c.b16 %v711, %v709
      %v760 = vpack.c.b16 %v714, %v712
      %v761 = vpack.c.b16 %v715, %v713
      %v762 = vpack.c.b16 %v718, %v716
      %v763 = vpack.c.b16 %v719, %v717
      %v764 = vpack.c.b16 %v722, %v720
      %v765 = vpack.c.b16 %v723, %v721
      %v766 = vpack.c.b16 %v726, %v724
      %v767 = vpack.c.b16 %v727, %v725
      %v768 = vpack.c.b16 %v730, %v728
      %v769 = vpack.c.b16 %v731, %v729
      %v770 = vpack.c.b16 %v734, %v732
      %v771 = vpack.c.b16 %v735, %v733
      %v772 = vpack.c.b16 %v738, %v736
      %v773 = vpack.c.b16 %v739, %v737
      %v774 = vpack.c.b16 %v742, %v740
      %v775 = vpack.c.b16 %v743, %v741
      %808 = vmatprep.subr.bf16.mxu0 %v745
      %809 = vmatpush1.bf16.msra.mxu0 %v744
      %810 = vmatprep.subr.bf16.mxu0 %v747
      %811 = vmatpush1.bf16.msra.mxu0 %v746
      %812 = vmatprep.subr.bf16.mxu0 %v749
      %813 = vmatpush1.bf16.msra.mxu0 %v748
      %814 = vmatprep.subr.bf16.mxu0 %v751
      %815 = vmatpush1.bf16.msra.mxu0 %v750
      %816 = vmatprep.subr.bf16.mxu0 %v753
      %817 = vmatpush1.bf16.msra.mxu0 %v752
      %818 = vmatprep.subr.bf16.mxu0 %v755
      %819 = vmatpush1.bf16.msra.mxu0 %v754
      %820 = vmatprep.subr.bf16.mxu0 %v757
      %821 = vmatpush1.bf16.msra.mxu0 %v756
      %822 = vmatprep.subr.bf16.mxu0 %v759
      %823 = vmatpush1.bf16.msra.mxu0 %v758
      %824 = vmatprep.subr.bf16.mxu0 %v761
      %825 = vmatpush1.bf16.msra.mxu0 %v760
      %826 = vmatprep.subr.bf16.mxu0 %v763
      %827 = vmatpush1.bf16.msra.mxu0 %v762
      %828 = vmatprep.subr.bf16.mxu0 %v765
      %829 = vmatpush1.bf16.msra.mxu0 %v764
      %830 = vmatprep.subr.bf16.mxu0 %v767
      %831 = vmatpush1.bf16.msra.mxu0 %v766
      %832 = vmatprep.subr.bf16.mxu0 %v769
      %833 = vmatpush1.bf16.msra.mxu0 %v768
      %834 = vmatprep.subr.bf16.mxu0 %v771
      %835 = vmatpush1.bf16.msra.mxu0 %v770
      %836 = vmatprep.subr.bf16.mxu0 %v773
      %837 = vmatpush1.bf16.msra.mxu0 %v772
      %838 = vmatprep.subr.bf16.mxu0 %v775
      %839 = vmatpush1.bf16.msra.mxu0 %v774
      %840 = vmatprep.mubr.bf16.mxu0 %v589
      %841 = vmatmul.mubr.bf16.gmra.mrb[0].mxu0 %v588
      %v842 = vpop.f32.mrb[0].mxu0
      %v843 = vadd.f32 %v641, %v842
      %v844 = vpop.f32.mrb[0].mxu0
      %v845 = vadd.f32 %v645, %v844
      %v846 = vpop.f32.mrb[0].mxu0
      %v847 = vadd.f32 %v641, %v846
      %v848 = vpop.f32.mrb[0].mxu0
      %v849 = vadd.f32 %v645, %v848
      %850 = vmatprep.mubr.bf16.mxu0 %v591
      %851 = vmatmul.mubr.bf16.gmra.mrb[0].mxu0 %v590
      %v852 = vpop.f32.mrb[0].mxu0
      %v853 = vadd.f32 %v641, %v852
      %v854 = vpop.f32.mrb[0].mxu0
      %v855 = vadd.f32 %v645, %v854
      %v856 = vpop.f32.mrb[0].mxu0
      %v857 = vadd.f32 %v641, %v856
      %v858 = vpop.f32.mrb[0].mxu0
      %v859 = vadd.f32 %v645, %v858
      %860 = vmatprep.mubr.bf16.mxu0 %v593
      %861 = vmatmul.mubr.bf16.gmra.mrb[0].mxu0 %v592
      %v862 = vpop.f32.mrb[0].mxu0
      %v863 = vadd.f32 %v641, %v862
      %v864 = vpop.f32.mrb[0].mxu0
      %v865 = vadd.f32 %v645, %v864
      %v866 = vpop.f32.mrb[0].mxu0
      %v867 = vadd.f32 %v641, %v866
      %v868 = vpop.f32.mrb[0].mxu0
      %v869 = vadd.f32 %v645, %v868
      %870 = vmatprep.mubr.bf16.mxu0 %v595
      %871 = vmatmul.mubr.bf16.gmra.mrb[0].mxu0 %v594
      %v872 = vpop.f32.mrb[0].mxu0
      %v873 = vadd.f32 %v641, %v872
      %v874 = vpop.f32.mrb[0].mxu0
      %v875 = vadd.f32 %v645, %v874
      %v876 = vpop.f32.mrb[0].mxu0
      %v877 = vadd.f32 %v641, %v876
      %v878 = vpop.f32.mrb[0].mxu0
      %v879 = vadd.f32 %v645, %v878
      %880 = vmatprep.mubr.bf16.mxu0 %v597
      %881 = vmatmul.mubr.bf16.gmra.mrb[0].mxu0 %v596
      %v882 = vpop.f32.mrb[0].mxu0
      %v883 = vadd.f32 %v641, %v882
      %v884 = vpop.f32.mrb[0].mxu0
      %v885 = vadd.f32 %v645, %v884
      %v886 = vpop.f32.mrb[0].mxu0
      %v887 = vadd.f32 %v641, %v886
      %v888 = vpop.f32.mrb[0].mxu0
      %v889 = vadd.f32 %v645, %v888
      %890 = vmatprep.mubr.bf16.mxu0 %v599
      %891 = vmatmul.mubr.bf16.gmra.mrb[0].mxu0 %v598
      %v892 = vpop.f32.mrb[0].mxu0
      %v893 = vadd.f32 %v641, %v892
      %v894 = vpop.f32.mrb[0].mxu0
      %v895 = vadd.f32 %v645, %v894
      %v896 = vpop.f32.mrb[0].mxu0
      %v897 = vadd.f32 %v641, %v896
      %v898 = vpop.f32.mrb[0].mxu0
      %v899 = vadd.f32 %v645, %v898
      %900 = vmatprep.mubr.bf16.mxu0 %v601
      %901 = vmatmul.mubr.bf16.gmra.mrb[0].mxu0 %v600
      %v902 = vpop.f32.mrb[0].mxu0
      %v903 = vadd.f32 %v641, %v902
      %v904 = vpop.f32.mrb[0].mxu0
      %v905 = vadd.f32 %v645, %v904
      %v906 = vpop.f32.mrb[0].mxu0
      %v907 = vadd.f32 %v641, %v906
      %v908 = vpop.f32.mrb[0].mxu0
      %v909 = vadd.f32 %v645, %v908
      %910 = vmatprep.mubr.bf16.mxu0 %v603
      %911 = vmatmul.mubr.bf16.gmra.mrb[0].mxu0 %v602
      %v912 = vpop.f32.mrb[0].mxu0
      %v913 = vadd.f32 %v641, %v912
      %v914 = vpop.f32.mrb[0].mxu0
      %v915 = vadd.f32 %v645, %v914
      %v916 = vpop.f32.mrb[0].mxu0
      %v917 = vadd.f32 %v641, %v916
      %v918 = vpop.f32.mrb[0].mxu0
      %v919 = vadd.f32 %v645, %v918
      %920 = vdwg.mxu0
      %v921 = vmax.f32 %v843, 0.0
      %v922 = vmax.f32 %v845, 0.0
      %v923 = vmax.f32 %v847, 0.0
      %v924 = vmax.f32 %v849, 0.0
      %v925 = vmax.f32 %v853, 0.0
      %v926 = vmax.f32 %v855, 0.0
      %v927 = vmax.f32 %v857, 0.0
      %v928 = vmax.f32 %v859, 0.0
      %v929 = vmax.f32 %v863, 0.0
      %v930 = vmax.f32 %v865, 0.0
      %v931 = vmax.f32 %v867, 0.0
      %v932 = vmax.f32 %v869, 0.0
      %v933 = vmax.f32 %v873, 0.0
      %v934 = vmax.f32 %v875, 0.0
      %v935 = vmax.f32 %v877, 0.0
      %v936 = vmax.f32 %v879, 0.0
      %v937 = vmax.f32 %v883, 0.0
      %v938 = vmax.f32 %v885, 0.0
      %v939 = vmax.f32 %v887, 0.0
      %v940 = vmax.f32 %v889, 0.0
      %v941 = vmax.f32 %v893, 0.0
      %v942 = vmax.f32 %v895, 0.0
      %v943 = vmax.f32 %v897, 0.0
      %v944 = vmax.f32 %v899, 0.0
      %v945 = vmax.f32 %v903, 0.0
      %v946 = vmax.f32 %v905, 0.0
      %v947 = vmax.f32 %v907, 0.0
      %v948 = vmax.f32 %v909, 0.0
      %v949 = vmax.f32 %v913, 0.0
      %v950 = vmax.f32 %v915, 0.0
      %v951 = vmax.f32 %v917, 0.0
      %v952 = vmax.f32 %v919, 0.0
      %v953 = vpack.c.bf16 %v923, %v921
      %v954 = vpack.c.bf16 %v924, %v922
      %v955 = vpack.c.bf16 %v927, %v925
      %v956 = vpack.c.bf16 %v928, %v926
      %v957 = vpack.c.bf16 %v931, %v929
      %v958 = vpack.c.bf16 %v932, %v930
      %v959 = vpack.c.bf16 %v935, %v933
      %v960 = vpack.c.bf16 %v936, %v934
      %v961 = vpack.c.bf16 %v939, %v937
      %v962 = vpack.c.bf16 %v940, %v938
      %v963 = vpack.c.bf16 %v943, %v941
      %v964 = vpack.c.bf16 %v944, %v942
      %v965 = vpack.c.bf16 %v947, %v945
      %v966 = vpack.c.bf16 %v948, %v946
      %v967 = vpack.c.bf16 %v951, %v949
      %v968 = vpack.c.bf16 %v952, %v950
      %v969 = vld [vmem:[%s5] sm:$0xff]
      %v970 = vld [vmem:[%s5 + $0x8] sm:$0xff]
      %v971 = vld [vmem:[%s5 + $0x10] sm:$0xff]
      %v972 = vld [vmem:[%s5 + $0x18] sm:$0xff]
      %v973 = vld [vmem:[%s5 + $0x20] sm:$0xff]
      %v974 = vld [vmem:[%s5 + $0x28] sm:$0xff]
      %v975 = vld [vmem:[%s5 + $0x30] sm:$0xff]
      %v976 = vld [vmem:[%s5 + $0x38] sm:$0xff]
      %v977 = vld [vmem:[%s5 + $0x40] sm:$0xff]
      %v978 = vld [vmem:[%s5 + $0x48] sm:$0xff]
      %v979 = vld [vmem:[%s5 + $0x50] sm:$0xff]
      %v980 = vld [vmem:[%s5 + $0x58] sm:$0xff]
      %v981 = vld [vmem:[%s5 + $0x60] sm:$0xff]
      %v982 = vld [vmem:[%s5 + $0x68] sm:$0xff]
      %v983 = vld [vmem:[%s5 + $0x70] sm:$0xff]
      %v984 = vld [vmem:[%s5 + $0x78] sm:$0xff]
      %v985 = vld [vmem:[%s5 + $0x80] sm:$0xff]
      %v986 = vld [vmem:[%s5 + $0x88] sm:$0xff]
      %v987 = vld [vmem:[%s5 + $0x90] sm:$0xff]
      %v988 = vld [vmem:[%s5 + $0x98] sm:$0xff]
      %v989 = vld [vmem:[%s5 + $0xa0] sm:$0xff]
      %v990 = vld [vmem:[%s5 + $0xa8] sm:$0xff]
      %v991 = vld [vmem:[%s5 + $0xb0] sm:$0xff]
      %v992 = vld [vmem:[%s5 + $0xb8] sm:$0xff]
      %v993 = vld [vmem:[%s5 + $0xc0] sm:$0xff]
      %v994 = vld [vmem:[%s5 + $0xc8] sm:$0xff]
      %v995 = vld [vmem:[%s5 + $0xd0] sm:$0xff]
      %v996 = vld [vmem:[%s5 + $0xd8] sm:$0xff]
      %v997 = vld [vmem:[%s5 + $0xe0] sm:$0xff]
      %v998 = vld [vmem:[%s5 + $0xe8] sm:$0xff]
      %v999 = vld [vmem:[%s5 + $0xf0] sm:$0xff]
      %v1000 = vld [vmem:[%s5 + $0xf8] sm:$0xff]
      %v1001 = vld [vmem:[%s6] sm:$0x3]
      %v1003 = vlaneseq
      %v1004 = vshrl.u32 %v1003, 7
      %v1005 = vsub.s32 0, %v1004
      %v1006 = vrot.slane %v1001, %v1005
      %v1007 = vlaneseq
      %v1008 = vshrl.u32 %v1007, 7
      %v1009 = vsub.s32 1, %v1008
      %v1010 = vrot.slane %v1001, %v1009
      %v1045 = vunpack.c.l.b16 %v969
      %v1046 = vunpack.c.h.b16 %v969
      %v1047 = vunpack.c.l.b16 %v970
      %v1048 = vunpack.c.h.b16 %v970
      %v1049 = vunpack.c.l.b16 %v971
      %v1050 = vunpack.c.h.b16 %v971
      %v1051 = vunpack.c.l.b16 %v972
      %v1052 = vunpack.c.h.b16 %v972
      %v1053 = vunpack.c.l.b16 %v973
      %v1054 = vunpack.c.h.b16 %v973
      %v1055 = vunpack.c.l.b16 %v974
      %v1056 = vunpack.c.h.b16 %v974
      %v1057 = vunpack.c.l.b16 %v975
      %v1058 = vunpack.c.h.b16 %v975
      %v1059 = vunpack.c.l.b16 %v976
      %v1060 = vunpack.c.h.b16 %v976
      %v1061 = vunpack.c.l.b16 %v977
      %v1062 = vunpack.c.h.b16 %v977
      %v1063 = vunpack.c.l.b16 %v978
      %v1064 = vunpack.c.h.b16 %v978
      %v1065 = vunpack.c.l.b16 %v979
      %v1066 = vunpack.c.h.b16 %v979
      %v1067 = vunpack.c.l.b16 %v980
      %v1068 = vunpack.c.h.b16 %v980
      %v1069 = vunpack.c.l.b16 %v981
      %v1070 = vunpack.c.h.b16 %v981
      %v1071 = vunpack.c.l.b16 %v982
      %v1072 = vunpack.c.h.b16 %v982
      %v1073 = vunpack.c.l.b16 %v983
      %v1074 = vunpack.c.h.b16 %v983
      %v1075 = vunpack.c.l.b16 %v984
      %v1076 = vunpack.c.h.b16 %v984
      %v1077 = vunpack.c.l.b16 %v985
      %v1078 = vunpack.c.h.b16 %v985
      %v1079 = vunpack.c.l.b16 %v986
      %v1080 = vunpack.c.h.b16 %v986
      %v1081 = vunpack.c.l.b16 %v987
      %v1082 = vunpack.c.h.b16 %v987
      %v1083 = vunpack.c.l.b16 %v988
      %v1084 = vunpack.c.h.b16 %v988
      %v1085 = vunpack.c.l.b16 %v989
      %v1086 = vunpack.c.h.b16 %v989
      %v1087 = vunpack.c.l.b16 %v990
      %v1088 = vunpack.c.h.b16 %v990
      %v1089 = vunpack.c.l.b16 %v991
      %v1090 = vunpack.c.h.b16 %v991
      %v1091 = vunpack.c.l.b16 %v992
      %v1092 = vunpack.c.h.b16 %v992
      %v1093 = vunpack.c.l.b16 %v993
      %v1094 = vunpack.c.h.b16 %v993
      %v1095 = vunpack.c.l.b16 %v994
      %v1096 = vunpack.c.h.b16 %v994
      %v1097 = vunpack.c.l.b16 %v995
      %v1098 = vunpack.c.h.b16 %v995
      %v1099 = vunpack.c.l.b16 %v996
      %v1100 = vunpack.c.h.b16 %v996
      %v1101 = vunpack.c.l.b16 %v997
      %v1102 = vunpack.c.h.b16 %v997
      %v1103 = vunpack.c.l.b16 %v998
      %v1104 = vunpack.c.h.b16 %v998
      %v1105 = vunpack.c.l.b16 %v999
      %v1106 = vunpack.c.h.b16 %v999
      %v1107 = vunpack.c.l.b16 %v1000
      %v1108 = vunpack.c.h.b16 %v1000
      %v1109 = vpack.c.b16 %v1047, %v1045
      %v1110 = vpack.c.b16 %v1048, %v1046
      %v1111 = vpack.c.b16 %v1051, %v1049
      %v1112 = vpack.c.b16 %v1052, %v1050
      %v1113 = vpack.c.b16 %v1055, %v1053
      %v1114 = vpack.c.b16 %v1056, %v1054
      %v1115 = vpack.c.b16 %v1059, %v1057
      %v1116 = vpack.c.b16 %v1060, %v1058
      %v1117 = vpack.c.b16 %v1063, %v1061
      %v1118 = vpack.c.b16 %v1064, %v1062
      %v1119 = vpack.c.b16 %v1067, %v1065
      %v1120 = vpack.c.b16 %v1068, %v1066
      %v1121 = vpack.c.b16 %v1071, %v1069
      %v1122 = vpack.c.b16 %v1072, %v1070
      %v1123 = vpack.c.b16 %v1075, %v1073
      %v1124 = vpack.c.b16 %v1076, %v1074
      %v1125 = vpack.c.b16 %v1079, %v1077
      %v1126 = vpack.c.b16 %v1080, %v1078
      %v1127 = vpack.c.b16 %v1083, %v1081
      %v1128 = vpack.c.b16 %v1084, %v1082
      %v1129 = vpack.c.b16 %v1087, %v1085
      %v1130 = vpack.c.b16 %v1088, %v1086
      %v1131 = vpack.c.b16 %v1091, %v1089
      %v1132 = vpack.c.b16 %v1092, %v1090
      %v1133 = vpack.c.b16 %v1095, %v1093
      %v1134 = vpack.c.b16 %v1096, %v1094
      %v1135 = vpack.c.b16 %v1099, %v1097
      %v1136 = vpack.c.b16 %v1100, %v1098
      %v1137 = vpack.c.b16 %v1103, %v1101
      %v1138 = vpack.c.b16 %v1104, %v1102
      %v1139 = vpack.c.b16 %v1107, %v1105
      %v1140 = vpack.c.b16 %v1108, %v1106
      %1173 = vmatprep.subr.bf16.mxu0 %v1110
      %1174 = vmatpush1.bf16.msra.mxu0 %v1109
      %1175 = vmatprep.subr.bf16.mxu0 %v1112
      %1176 = vmatpush1.bf16.msra.mxu0 %v1111
      %1177 = vmatprep.subr.bf16.mxu0 %v1114
      %1178 = vmatpush1.bf16.msra.mxu0 %v1113
      %1179 = vmatprep.subr.bf16.mxu0 %v1116
      %1180 = vmatpush1.bf16.msra.mxu0 %v1115
      %1181 = vmatprep.subr.bf16.mxu0 %v1118
      %1182 = vmatpush1.bf16.msra.mxu0 %v1117
      %1183 = vmatprep.subr.bf16.mxu0 %v1120
      %1184 = vmatpush1.bf16.msra.mxu0 %v1119
      %1185 = vmatprep.subr.bf16.mxu0 %v1122
      %1186 = vmatpush1.bf16.msra.mxu0 %v1121
      %1187 = vmatprep.subr.bf16.mxu0 %v1124
      %1188 = vmatpush1.bf16.msra.mxu0 %v1123
      %1189 = vmatprep.subr.bf16.mxu0 %v1126
      %1190 = vmatpush1.bf16.msra.mxu0 %v1125
      %1191 = vmatprep.subr.bf16.mxu0 %v1128
      %1192 = vmatpush1.bf16.msra.mxu0 %v1127
      %1193 = vmatprep.subr.bf16.mxu0 %v1130
      %1194 = vmatpush1.bf16.msra.mxu0 %v1129
      %1195 = vmatprep.subr.bf16.mxu0 %v1132
      %1196 = vmatpush1.bf16.msra.mxu0 %v1131
      %1197 = vmatprep.subr.bf16.mxu0 %v1134
      %1198 = vmatpush1.bf16.msra.mxu0 %v1133
      %1199 = vmatprep.subr.bf16.mxu0 %v1136
      %1200 = vmatpush1.bf16.msra.mxu0 %v1135
      %1201 = vmatprep.subr.bf16.mxu0 %v1138
      %1202 = vmatpush1.bf16.msra.mxu0 %v1137
      %1203 = vmatprep.subr.bf16.mxu0 %v1140
      %1204 = vmatpush1.bf16.msra.mxu0 %v1139
      %1205 = vmatprep.mubr.bf16.mxu0 %v954
      %1206 = vmatmul.mubr.bf16.gmra.mrb[0].mxu0 %v953
      %v1207 = vpop.f32.mrb[0].mxu0
      %v1208 = vadd.f32 %v1006, %v1207
      %v1209 = vpop.f32.mrb[0].mxu0
      %v1210 = vadd.f32 %v1010, %v1209
      %v1211 = vpop.f32.mrb[0].mxu0
      %v1212 = vadd.f32 %v1006, %v1211
      %v1213 = vpop.f32.mrb[0].mxu0
      %v1214 = vadd.f32 %v1010, %v1213
      %1215 = vmatprep.mubr.bf16.mxu0 %v956
      %1216 = vmatmul.mubr.bf16.gmra.mrb[0].mxu0 %v955
      %v1217 = vpop.f32.mrb[0].mxu0
      %v1218 = vadd.f32 %v1006, %v1217
      %v1219 = vpop.f32.mrb[0].mxu0
      %v1220 = vadd.f32 %v1010, %v1219
      %v1221 = vpop.f32.mrb[0].mxu0
      %v1222 = vadd.f32 %v1006, %v1221
      %v1223 = vpop.f32.mrb[0].mxu0
      %v1224 = vadd.f32 %v1010, %v1223
      %1225 = vmatprep.mubr.bf16.mxu0 %v958
      %1226 = vmatmul.mubr.bf16.gmra.mrb[0].mxu0 %v957
      %v1227 = vpop.f32.mrb[0].mxu0
      %v1228 = vadd.f32 %v1006, %v1227
      %v1229 = vpop.f32.mrb[0].mxu0
      %v1230 = vadd.f32 %v1010, %v1229
      %v1231 = vpop.f32.mrb[0].mxu0
      %v1232 = vadd.f32 %v1006, %v1231
      %v1233 = vpop.f32.mrb[0].mxu0
      %v1234 = vadd.f32 %v1010, %v1233
      %1235 = vmatprep.mubr.bf16.mxu0 %v960
      %1236 = vmatmul.mubr.bf16.gmra.mrb[0].mxu0 %v959
      %v1237 = vpop.f32.mrb[0].mxu0
      %v1238 = vadd.f32 %v1006, %v1237
      %v1239 = vpop.f32.mrb[0].mxu0
      %v1240 = vadd.f32 %v1010, %v1239
      %v1241 = vpop.f32.mrb[0].mxu0
      %v1242 = vadd.f32 %v1006, %v1241
      %v1243 = vpop.f32.mrb[0].mxu0
      %v1244 = vadd.f32 %v1010, %v1243
      %1245 = vmatprep.mubr.bf16.mxu0 %v962
      %1246 = vmatmul.mubr.bf16.gmra.mrb[0].mxu0 %v961
      %v1247 = vpop.f32.mrb[0].mxu0
      %v1248 = vadd.f32 %v1006, %v1247
      %v1249 = vpop.f32.mrb[0].mxu0
      %v1250 = vadd.f32 %v1010, %v1249
      %v1251 = vpop.f32.mrb[0].mxu0
      %v1252 = vadd.f32 %v1006, %v1251
      %v1253 = vpop.f32.mrb[0].mxu0
      %v1254 = vadd.f32 %v1010, %v1253
      %1255 = vmatprep.mubr.bf16.mxu0 %v964
      %1256 = vmatmul.mubr.bf16.gmra.mrb[0].mxu0 %v963
      %v1257 = vpop.f32.mrb[0].mxu0
      %v1258 = vadd.f32 %v1006, %v1257
      %v1259 = vpop.f32.mrb[0].mxu0
      %v1260 = vadd.f32 %v1010, %v1259
      %v1261 = vpop.f32.mrb[0].mxu0
      %v1262 = vadd.f32 %v1006, %v1261
      %v1263 = vpop.f32.mrb[0].mxu0
      %v1264 = vadd.f32 %v1010, %v1263
      %1265 = vmatprep.mubr.bf16.mxu0 %v966
      %1266 = vmatmul.mubr.bf16.gmra.mrb[0].mxu0 %v965
      %v1267 = vpop.f32.mrb[0].mxu0
      %v1268 = vadd.f32 %v1006, %v1267
      %v1269 = vpop.f32.mrb[0].mxu0
      %v1270 = vadd.f32 %v1010, %v1269
      %v1271 = vpop.f32.mrb[0].mxu0
      %v1272 = vadd.f32 %v1006, %v1271
      %v1273 = vpop.f32.mrb[0].mxu0
      %v1274 = vadd.f32 %v1010, %v1273
      %1275 = vmatprep.mubr.bf16.mxu0 %v968
      %1276 = vmatmul.mubr.bf16.gmra.mrb[0].mxu0 %v967
      %v1277 = vpop.f32.mrb[0].mxu0
      %v1278 = vadd.f32 %v1006, %v1277
      %v1279 = vpop.f32.mrb[0].mxu0
      %v1280 = vadd.f32 %v1010, %v1279
      %v1281 = vpop.f32.mrb[0].mxu0
      %v1282 = vadd.f32 %v1006, %v1281
      %v1283 = vpop.f32.mrb[0].mxu0
      %v1284 = vadd.f32 %v1010, %v1283
      %1285 = vdwg.mxu0
      %v1286 = vmax.f32 %v1208, 0.0
      %v1287 = vmax.f32 %v1210, 0.0
      %v1288 = vmax.f32 %v1212, 0.0
      %v1289 = vmax.f32 %v1214, 0.0
      %v1290 = vmax.f32 %v1218, 0.0
      %v1291 = vmax.f32 %v1220, 0.0
      %v1292 = vmax.f32 %v1222, 0.0
      %v1293 = vmax.f32 %v1224, 0.0
      %v1294 = vmax.f32 %v1228, 0.0
      %v1295 = vmax.f32 %v1230, 0.0
      %v1296 = vmax.f32 %v1232, 0.0
      %v1297 = vmax.f32 %v1234, 0.0
      %v1298 = vmax.f32 %v1238, 0.0
      %v1299 = vmax.f32 %v1240, 0.0
      %v1300 = vmax.f32 %v1242, 0.0
      %v1301 = vmax.f32 %v1244, 0.0
      %v1302 = vmax.f32 %v1248, 0.0
      %v1303 = vmax.f32 %v1250, 0.0
      %v1304 = vmax.f32 %v1252, 0.0
      %v1305 = vmax.f32 %v1254, 0.0
      %v1306 = vmax.f32 %v1258, 0.0
      %v1307 = vmax.f32 %v1260, 0.0
      %v1308 = vmax.f32 %v1262, 0.0
      %v1309 = vmax.f32 %v1264, 0.0
      %v1310 = vmax.f32 %v1268, 0.0
      %v1311 = vmax.f32 %v1270, 0.0
      %v1312 = vmax.f32 %v1272, 0.0
      %v1313 = vmax.f32 %v1274, 0.0
      %v1314 = vmax.f32 %v1278, 0.0
      %v1315 = vmax.f32 %v1280, 0.0
      %v1316 = vmax.f32 %v1282, 0.0
      %v1317 = vmax.f32 %v1284, 0.0
      %v1318 = vpack.c.bf16 %v1288, %v1286
      %v1319 = vpack.c.bf16 %v1289, %v1287
      %v1320 = vpack.c.bf16 %v1292, %v1290
      %v1321 = vpack.c.bf16 %v1293, %v1291
      %v1322 = vpack.c.bf16 %v1296, %v1294
      %v1323 = vpack.c.bf16 %v1297, %v1295
      %v1324 = vpack.c.bf16 %v1300, %v1298
      %v1325 = vpack.c.bf16 %v1301, %v1299
      %v1326 = vpack.c.bf16 %v1304, %v1302
      %v1327 = vpack.c.bf16 %v1305, %v1303
      %v1328 = vpack.c.bf16 %v1308, %v1306
      %v1329 = vpack.c.bf16 %v1309, %v1307
      %v1330 = vpack.c.bf16 %v1312, %v1310
      %v1331 = vpack.c.bf16 %v1313, %v1311
      %v1332 = vpack.c.bf16 %v1316, %v1314
      %v1333 = vpack.c.bf16 %v1317, %v1315
      %v1334 = vld [vmem:[%s7] sm:$0xf]
      %v1335 = vld [vmem:[%s7 + $0x4] sm:$0xf]
      %v1336 = vld [vmem:[%s7 + $0x8] sm:$0xf]
      %v1337 = vld [vmem:[%s7 + $0xc] sm:$0xf]
      %v1338 = vld [vmem:[%s7 + $0x10] sm:$0xf]
      %v1339 = vld [vmem:[%s7 + $0x14] sm:$0xf]
      %v1340 = vld [vmem:[%s7 + $0x18] sm:$0xf]
      %v1341 = vld [vmem:[%s7 + $0x1c] sm:$0xf]
      %v1342 = vld [vmem:[%s7 + $0x20] sm:$0xf]
      %v1343 = vld [vmem:[%s7 + $0x24] sm:$0xf]
      %v1344 = vld [vmem:[%s7 + $0x28] sm:$0xf]
      %v1345 = vld [vmem:[%s7 + $0x2c] sm:$0xf]
      %v1346 = vld [vmem:[%s7 + $0x30] sm:$0xf]
      %v1347 = vld [vmem:[%s7 + $0x34] sm:$0xf]
      %v1348 = vld [vmem:[%s7 + $0x38] sm:$0xf]
      %v1349 = vld [vmem:[%s7 + $0x3c] sm:$0xf]
      %v1350 = vld [vmem:[%s7 + $0x40] sm:$0xf]
      %v1351 = vld [vmem:[%s7 + $0x44] sm:$0xf]
      %v1352 = vld [vmem:[%s7 + $0x48] sm:$0xf]
      %v1353 = vld [vmem:[%s7 + $0x4c] sm:$0xf]
      %v1354 = vld [vmem:[%s7 + $0x50] sm:$0xf]
      %v1355 = vld [vmem:[%s7 + $0x54] sm:$0xf]
      %v1356 = vld [vmem:[%s7 + $0x58] sm:$0xf]
      %v1357 = vld [vmem:[%s7 + $0x5c] sm:$0xf]
      %v1358 = vld [vmem:[%s7 + $0x60] sm:$0xf]
      %v1359 = vld [vmem:[%s7 + $0x64] sm:$0xf]
      %v1360 = vld [vmem:[%s7 + $0x68] sm:$0xf]
      %v1361 = vld [vmem:[%s7 + $0x6c] sm:$0xf]
      %v1362 = vld [vmem:[%s7 + $0x70] sm:$0xf]
      %v1363 = vld [vmem:[%s7 + $0x74] sm:$0xf]
      %v1364 = vld [vmem:[%s7 + $0x78] sm:$0xf]
      %v1365 = vld [vmem:[%s7 + $0x7c] sm:$0xf]
      %v1366 = vld [vmem:[%s8] sm:$0x1]
      %v1368 = vlaneseq
      %v1369 = vshrl.u32 %v1368, 7
      %v1370 = vsub.s32 0, %v1369
      %v1371 = vrot.slane %v1366, %v1370
      %v1405 = vunpack.c.l.b16 %v1334
      %v1406 = vunpack.c.l.b16 %v1335
      %v1407 = vunpack.c.l.b16 %v1336
      %v1408 = vunpack.c.l.b16 %v1337
      %v1409 = vunpack.c.l.b16 %v1338
      %v1410 = vunpack.c.l.b16 %v1339
      %v1411 = vunpack.c.l.b16 %v1340
      %v1412 = vunpack.c.l.b16 %v1341
      %v1413 = vunpack.c.l.b16 %v1342
      %v1414 = vunpack.c.l.b16 %v1343
      %v1415 = vunpack.c.l.b16 %v1344
      %v1416 = vunpack.c.l.b16 %v1345
      %v1417 = vunpack.c.l.b16 %v1346
      %v1418 = vunpack.c.l.b16 %v1347
      %v1419 = vunpack.c.l.b16 %v1348
      %v1420 = vunpack.c.l.b16 %v1349
      %v1421 = vunpack.c.l.b16 %v1350
      %v1422 = vunpack.c.l.b16 %v1351
      %v1423 = vunpack.c.l.b16 %v1352
      %v1424 = vunpack.c.l.b16 %v1353
      %v1425 = vunpack.c.l.b16 %v1354
      %v1426 = vunpack.c.l.b16 %v1355
      %v1427 = vunpack.c.l.b16 %v1356
      %v1428 = vunpack.c.l.b16 %v1357
      %v1429 = vunpack.c.l.b16 %v1358
      %v1430 = vunpack.c.l.b16 %v1359
      %v1431 = vunpack.c.l.b16 %v1360
      %v1432 = vunpack.c.l.b16 %v1361
      %v1433 = vunpack.c.l.b16 %v1362
      %v1434 = vunpack.c.l.b16 %v1363
      %v1435 = vunpack.c.l.b16 %v1364
      %v1436 = vunpack.c.l.b16 %v1365
      %v1437 = vpack.c.b16 %v1406, %v1405
      %v1438 = vpack.c.b16 %v1408, %v1407
      %v1439 = vpack.c.b16 %v1410, %v1409
      %v1440 = vpack.c.b16 %v1412, %v1411
      %v1441 = vpack.c.b16 %v1414, %v1413
      %v1442 = vpack.c.b16 %v1416, %v1415
      %v1443 = vpack.c.b16 %v1418, %v1417
      %v1444 = vpack.c.b16 %v1420, %v1419
      %v1445 = vpack.c.b16 %v1422, %v1421
      %v1446 = vpack.c.b16 %v1424, %v1423
      %v1447 = vpack.c.b16 %v1426, %v1425
      %v1448 = vpack.c.b16 %v1428, %v1427
      %v1449 = vpack.c.b16 %v1430, %v1429
      %v1450 = vpack.c.b16 %v1432, %v1431
      %v1451 = vpack.c.b16 %v1434, %v1433
      %v1452 = vpack.c.b16 %v1436, %v1435
      %1469 = vmatprep.subr.bf16.mxu0 0
      %1470 = vmatpush1.bf16.msra.mxu0 %v1437
      %1471 = vmatprep.subr.bf16.mxu0 0
      %1472 = vmatpush1.bf16.msra.mxu0 %v1438
      %1473 = vmatprep.subr.bf16.mxu0 0
      %1474 = vmatpush1.bf16.msra.mxu0 %v1439
      %1475 = vmatprep.subr.bf16.mxu0 0
      %1476 = vmatpush1.bf16.msra.mxu0 %v1440
      %1477 = vmatprep.subr.bf16.mxu0 0
      %1478 = vmatpush1.bf16.msra.mxu0 %v1441
      %1479 = vmatprep.subr.bf16.mxu0 0
      %1480 = vmatpush1.bf16.msra.mxu0 %v1442
      %1481 = vmatprep.subr.bf16.mxu0 0
      %1482 = vmatpush1.bf16.msra.mxu0 %v1443
      %1483 = vmatprep.subr.bf16.mxu0 0
      %1484 = vmatpush1.bf16.msra.mxu0 %v1444
      %1485 = vmatprep.subr.bf16.mxu0 0
      %1486 = vmatpush1.bf16.msra.mxu0 %v1445
      %1487 = vmatprep.subr.bf16.mxu0 0
      %1488 = vmatpush1.bf16.msra.mxu0 %v1446
      %1489 = vmatprep.subr.bf16.mxu0 0
      %1490 = vmatpush1.bf16.msra.mxu0 %v1447
      %1491 = vmatprep.subr.bf16.mxu0 0
      %1492 = vmatpush1.bf16.msra.mxu0 %v1448
      %1493 = vmatprep.subr.bf16.mxu0 0
      %1494 = vmatpush1.bf16.msra.mxu0 %v1449
      %1495 = vmatprep.subr.bf16.mxu0 0
      %1496 = vmatpush1.bf16.msra.mxu0 %v1450
      %1497 = vmatprep.subr.bf16.mxu0 0
      %1498 = vmatpush1.bf16.msra.mxu0 %v1451
      %1499 = vmatprep.subr.bf16.mxu0 0
      %1500 = vmatpush1.bf16.msra.mxu0 %v1452
      %1501 = vmatprep.mubr.bf16.mxu0 %v1319
      %1502 = vmatmul.mubr.bf16.gmra.mrb[0].mxu0 %v1318
      %v1503 = vpop.f32.mrb[0].mxu0
      %v1504 = vadd.f32 %v1371, %v1503
      %v1505 = vpop.f32.mrb[0].mxu0
      %v1506 = vpop.f32.mrb[0].mxu0
      %v1507 = vadd.f32 %v1371, %v1506
      %v1508 = vpop.f32.mrb[0].mxu0
      %1509 = vmatprep.mubr.bf16.mxu0 %v1321
      %1510 = vmatmul.mubr.bf16.gmra.mrb[0].mxu0 %v1320
      %v1511 = vpop.f32.mrb[0].mxu0
      %v1512 = vadd.f32 %v1371, %v1511
      %v1513 = vpop.f32.mrb[0].mxu0
      %v1514 = vpop.f32.mrb[0].mxu0
      %v1515 = vadd.f32 %v1371, %v1514
      %v1516 = vpop.f32.mrb[0].mxu0
      %1517 = vmatprep.mubr.bf16.mxu0 %v1323
      %1518 = vmatmul.mubr.bf16.gmra.mrb[0].mxu0 %v1322
      %v1519 = vpop.f32.mrb[0].mxu0
      %v1520 = vadd.f32 %v1371, %v1519
      %v1521 = vpop.f32.mrb[0].mxu0
      %v1522 = vpop.f32.mrb[0].mxu0
      %v1523 = vadd.f32 %v1371, %v1522
      %v1524 = vpop.f32.mrb[0].mxu0
      %1525 = vmatprep.mubr.bf16.mxu0 %v1325
      %1526 = vmatmul.mubr.bf16.gmra.mrb[0].mxu0 %v1324
      %v1527 = vpop.f32.mrb[0].mxu0
      %v1528 = vadd.f32 %v1371, %v1527
      %v1529 = vpop.f32.mrb[0].mxu0
      %v1530 = vpop.f32.mrb[0].mxu0
      %v1531 = vadd.f32 %v1371, %v1530
      %v1532 = vpop.f32.mrb[0].mxu0
      %1533 = vmatprep.mubr.bf16.mxu0 %v1327
      %1534 = vmatmul.mubr.bf16.gmra.mrb[0].mxu0 %v1326
      %v1535 = vpop.f32.mrb[0].mxu0
      %v1536 = vadd.f32 %v1371, %v1535
      %v1537 = vpop.f32.mrb[0].mxu0
      %v1538 = vpop.f32.mrb[0].mxu0
      %v1539 = vadd.f32 %v1371, %v1538
      %v1540 = vpop.f32.mrb[0].mxu0
      %1541 = vmatprep.mubr.bf16.mxu0 %v1329
      %1542 = vmatmul.mubr.bf16.gmra.mrb[0].mxu0 %v1328
      %v1543 = vpop.f32.mrb[0].mxu0
      %v1544 = vadd.f32 %v1371, %v1543
      %v1545 = vpop.f32.mrb[0].mxu0
      %v1546 = vpop.f32.mrb[0].mxu0
      %v1547 = vadd.f32 %v1371, %v1546
      %v1548 = vpop.f32.mrb[0].mxu0
      %1549 = vmatprep.mubr.bf16.mxu0 %v1331
      %1550 = vmatmul.mubr.bf16.gmra.mrb[0].mxu0 %v1330
      %v1551 = vpop.f32.mrb[0].mxu0
      %v1552 = vadd.f32 %v1371, %v1551
      %v1553 = vpop.f32.mrb[0].mxu0
      %v1554 = vpop.f32.mrb[0].mxu0
      %v1555 = vadd.f32 %v1371, %v1554
      %v1556 = vpop.f32.mrb[0].mxu0
      %1557 = vmatprep.mubr.bf16.mxu0 %v1333
      %1558 = vmatmul.mubr.bf16.gmra.mrb[0].mxu0 %v1332
      %v1559 = vpop.f32.mrb[0].mxu0
      %v1560 = vadd.f32 %v1371, %v1559
      %v1561 = vpop.f32.mrb[0].mxu0
      %v1562 = vpop.f32.mrb[0].mxu0
      %v1563 = vadd.f32 %v1371, %v1562
      %v1564 = vpop.f32.mrb[0].mxu0
      %1565 = vdwg.mxu0
      %1566 = vst.msk [vmem:[%s334] sm:$0xff] %vm411, %v1504
      %1567 = vst.msk [vmem:[%s334 + $0x8] sm:$0xff] %vm411, %v1507
      %1568 = vst.msk [vmem:[%s334 + $0x10] sm:$0xff] %vm411, %v1512
      %1569 = vst.msk [vmem:[%s334 + $0x18] sm:$0xff] %vm411, %v1515
      %1570 = vst.msk [vmem:[%s334 + $0x20] sm:$0xff] %vm411, %v1520
      %1571 = vst.msk [vmem:[%s334 + $0x28] sm:$0xff] %vm411, %v1523
      %1572 = vst.msk [vmem:[%s334 + $0x30] sm:$0xff] %vm411, %v1528
      %1573 = vst.msk [vmem:[%s334 + $0x38] sm:$0xff] %vm411, %v1531
      %1574 = vst.msk [vmem:[%s334 + $0x40] sm:$0xff] %vm411, %v1536
      %1575 = vst.msk [vmem:[%s334 + $0x48] sm:$0xff] %vm411, %v1539
      %1576 = vst.msk [vmem:[%s334 + $0x50] sm:$0xff] %vm411, %v1544
      %1577 = vst.msk [vmem:[%s334 + $0x58] sm:$0xff] %vm411, %v1547
      %1578 = vst.msk [vmem:[%s334 + $0x60] sm:$0xff] %vm411, %v1552
      %1579 = vst.msk [vmem:[%s334 + $0x68] sm:$0xff] %vm411, %v1555
      %1580 = vst.msk [vmem:[%s334 + $0x70] sm:$0xff] %vm411, %v1560
      %1581 = vst.msk [vmem:[%s334 + $0x78] sm:$0xff] %vm411, %v1563
      %s1582 = smul.u32 16, %s20
      %p1583 = scmp.lt.s32.totalorder %s1582, 63
      %s1584 = scalar_select %p1583, %s1582, 63
      %s1585 = smul.addr %s1584, 8
      %s1586 = scalar_lea.vmem %s9, %s1585
      // Predicated region
      $region57: #{mlp_forward.1} parent=55 // pred_check
        %p1587 = pneg %p232
      $region58: #{mlp_forward.1} parent=55 // pred_check_branch
        %1589 = sbr.rel (%p1587) target = $region60
      $region59: #{mlp_forward.1} parent=55 // pred_region
        %s1590 = smul.u32 16, %s20
      $region60: #{mlp_forward.1} parent=55 // pred_fallthru
        _
    $region56: #{mlp_forward.1} parent=5 // pred_fallthru
      _
    %p1591 = scmp.le.s32.totalorder 2, %s15
    // Predicated region
    $region61: #{mlp_forward.1} parent=5 // pred_check
      %p1592 = pneg %p1591
    $region62: #{mlp_forward.1} parent=5 // pred_check_branch
      %1594 = sbr.rel (%p1592) target = $region64
    $region63: #{mlp_forward.1} parent=5 // pred_region
      %s1595 = ssub.s32 %s15, 2
      // Predicated region
      $region65: #{mlp_forward.1} parent=63 // pred_check
        %p1596 = pneg %p238
      $region66: #{mlp_forward.1} parent=63 // pred_check_branch
        %1598 = sbr.rel (%p1596) target = $region68
      $region67: #{mlp_forward.1} parent=63 // pred_region
        %s1599 = smul.u32 16, %s21
        %p1600 = scmp.lt.s32.totalorder %s1599, 63
        %s1601 = scalar_select %p1600, %s1599, 63
        %s1602 = smul.addr %s1601, 8
        %s1603 = scalar_lea.vmem %s9, %s1602
      $region68: #{mlp_forward.1} parent=63 // pred_fallthru
        _
    $region64: #{mlp_forward.1} parent=5 // pred_fallthru
      _
  $region6: #{mlp_forward.1} parent=0 // loop_footer
    %s19 = sadd.s32 1, %s15
  $region7: #{mlp_forward.1} parent=0 // loop_footer_branch
    %14 = sbr.rel target = $region3
  $region8: #{mlp_forward.1} parent=0 // loop_exit
    _

</llo_original>
